<compile_context>
chip_gen: v7x
topology: tpu7x:2x2x1
jax: 0.10.0
libtpu: 0.0.40
codegen_flags: <defaults>
</compile_context>

<pallas_src>
import functools

import jax
import jax.numpy as jnp
from jax.experimental import pallas as pl
from jax.experimental.pallas import tpu as pltpu


_TAPS = tuple((dy, dx) for dy in (-1, 0, 1) for dx in (-1, 0, 1))


# ----------------------------------------------------------------------------
# Fused kernel: one grid step == one image of the batch.
# ----------------------------------------------------------------------------
def _anchor_fused_kernel(x_ref, sw_ref, sb_ref, w1_ref, b1_ref, w2_ref, b2_ref,
                         fcwt_ref, fcb_ref,
                         feat_ref, logits_ref, probs_ref,
                         xp_ref, *, W):
    width, HW = x_ref.shape                      # (32, 256)
    lpad = (xp_ref.shape[1] - HW) // 2           # 128-aligned halo width

    # Only dx masks are needed (shared by all three convs): out-of-range rows
    # read the zeroed halo, and the two corner cases are also out-of-range in
    # x and caught here.  dx == 0 taps need no mask at all.
    xx = jax.lax.broadcasted_iota(jnp.int32, (1, HW), 1) % W
    ok_xm1 = xx >= 1                             # for dx == -1 taps
    ok_xp1 = xx <= W - 2                         # for dx == +1 taps

    def conv3x3(w_ref, b_ref):
        # 3x3 conv over whatever currently sits in the slab interior, as ONE
        # fused MXU matmul: stack the 9 shifted bf16 taps along sublanes into
        # a [9*width, HW] operand and multiply by the pre-fused [width, 9*width]
        # bf16 weight (f32 accumulation inside the MXU).
        patches = []
        for dy, dx in _TAPS:
            s = dy * W + dx
            p = xp_ref[:, lpad + s:lpad + s + HW]
            if dx == -1:
                p = jnp.where(ok_xm1, p, 0.0)
            elif dx == 1:
                p = jnp.where(ok_xp1, p, 0.0)
            patches.append(p)
        stacked = jnp.concatenate(patches, axis=0)            # (9*width, HW) bf16
        y = jnp.dot(w_ref[...], stacked, preferred_element_type=jnp.float32)
        return y + b_ref[...]                                  # bias over lanes

    # Zero only the two halos; the interior is always overwritten before use.
    zero_halo = jnp.zeros((width, lpad), jnp.bfloat16)
    xp_ref[:, :lpad] = zero_halo
    xp_ref[:, lpad + HW:] = zero_halo

    # --- stem conv + ReLU (input channels pre-padded with zeros to `width`) --
    xp_ref[:, lpad:lpad + HW] = x_ref[...]
    h = jnp.maximum(conv3x3(sw_ref, sb_ref), 0.0)

    # --- residual block: conv1 + ReLU ----------------------------------------
    xp_ref[:, lpad:lpad + HW] = h.astype(jnp.bfloat16)
    r = jnp.maximum(conv3x3(w1_ref, b1_ref), 0.0)

    # --- residual block: conv2 + skip + ReLU (skip `h` stays in vregs) -------
    xp_ref[:, lpad:lpad + HW] = r.astype(jnp.bfloat16)
    h = jnp.maximum(conv3x3(w2_ref, b2_ref) + h, 0.0)

    # --- global average pool -> feat, emitted as a lane-dense (1, width) row -
    feat_col = jnp.mean(h, axis=1, keepdims=True)              # (width, 1) f32
    rr = jax.lax.broadcasted_iota(jnp.int32, (width, width), 0)
    cc = jax.lax.broadcasted_iota(jnp.int32, (width, width), 1)
    # Robust sublane->lane flip of the small column (select + sublane reduce).
    feat_row = jnp.sum(jnp.where(rr == cc, feat_col, 0.0), axis=0, keepdims=True)
    feat_ref[...] = feat_row                                   # (1, width)

    # --- classifier on the pooled feature (mean is linear) + softmax ---------
    logits_row = (jnp.sum(fcwt_ref[...] * feat_col, axis=0, keepdims=True)
                  + fcb_ref[...])                              # (1, C)
    logits_ref[...] = logits_row
    m = jnp.max(logits_row, axis=1, keepdims=True)
    e = jnp.exp(logits_row - m)
    probs_ref[...] = e / jnp.sum(e, axis=1, keepdims=True)


# ----------------------------------------------------------------------------
# Public forward (wrapper does only layout plumbing; compute is in the kernel)
# ----------------------------------------------------------------------------
def anchor_net_forward(params, x_nchw):
    """AnchorNet.forward: returns {'feat', 'logits', 'probs'}."""
    x = x_nchw.astype(jnp.float32)
    N, Cin, H, W = x.shape
    width = params["stem_b"].shape[0]
    num_classes = params["fc_b"].shape[0]
    HW = H * W
    lpad = ((W + 1 + 127) // 128) * 128          # 128-aligned halo

    # --- weight / input layout plumbing (tiny, outside the kernel) -----------
    def conv_fused(w):
        # torch [Cout, Cin, 3, 3] -> fused [Cout, 9*width] bf16, where column
        # k*width + cin multiplies tap k (row-major (dy,dx)) of channel cin.
        cout, cin = w.shape[0], w.shape[1]
        taps = jnp.transpose(w, (2, 3, 0, 1)).reshape(9, cout, cin)
        if cin < width:                          # pad contraction dim to width
            taps = jnp.pad(taps, ((0, 0), (0, 0), (0, width - cin)))
        return (jnp.transpose(taps, (1, 0, 2))
                .reshape(cout, 9 * width).astype(jnp.bfloat16))

    sw = conv_fused(params["stem_w"])
    w1 = conv_fused(params["blk_w1"])
    w2 = conv_fused(params["blk_w2"])
    sb = params["stem_b"].reshape(width, 1).astype(jnp.float32)
    b1 = params["blk_b1"].reshape(width, 1).astype(jnp.float32)
    b2 = params["blk_b2"].reshape(width, 1).astype(jnp.float32)
    fcwt = jnp.transpose(params["fc_w"]).astype(jnp.float32)   # [width, C]
    fcb = params["fc_b"].reshape(1, num_classes).astype(jnp.float32)

    # NCHW -> [N, width, H*W] bf16 (channels on sublanes, spatial on lanes),
    # channels zero-padded to `width`.
    x_slab = jnp.pad(x.reshape(N, Cin, HW),
                     ((0, 0), (0, width - Cin), (0, 0))).astype(jnp.bfloat16)

    kernel = functools.partial(_anchor_fused_kernel, W=W)
    feat_t, logits_t, probs_t = pl.pallas_call(
        kernel,
        grid=(N,),
        in_specs=[
            pl.BlockSpec((None, width, HW), lambda n: (n, 0, 0)),      # x slab
            pl.BlockSpec((width, 9 * width), lambda n: (0, 0)),        # stem W
            pl.BlockSpec((width, 1), lambda n: (0, 0)),                # stem b
            pl.BlockSpec((width, 9 * width), lambda n: (0, 0)),        # blk W1
            pl.BlockSpec((width, 1), lambda n: (0, 0)),
            pl.BlockSpec((width, 9 * width), lambda n: (0, 0)),        # blk W2
            pl.BlockSpec((width, 1), lambda n: (0, 0)),
            pl.BlockSpec((width, num_classes), lambda n: (0, 0)),      # FC W^T
            pl.BlockSpec((1, num_classes), lambda n: (0, 0)),          # FC bias
        ],
        out_specs=(
            pl.BlockSpec((None, 1, width), lambda n: (n, 0, 0)),       # feat
            pl.BlockSpec((None, 1, num_classes), lambda n: (n, 0, 0)), # logits
            pl.BlockSpec((None, 1, num_classes), lambda n: (n, 0, 0)), # probs
        ),
        out_shape=(
            jax.ShapeDtypeStruct((N, 1, width), jnp.float32),
            jax.ShapeDtypeStruct((N, 1, num_classes), jnp.float32),
            jax.ShapeDtypeStruct((N, 1, num_classes), jnp.float32),
        ),
        scratch_shapes=[pltpu.VMEM((width, HW + 2 * lpad), jnp.bfloat16)],
        compiler_params=pltpu.CompilerParams(
            dimension_semantics=("parallel",)),   # batch over v7x's 2 TCs
    )(x_slab, sw, sb, w1, b1, w2, b2, fcwt, fcb)

    return {
        "feat": feat_t[:, 0, :],
        "logits": logits_t[:, 0, :],
        "probs": probs_t[:, 0, :],
    }


# ----------------------------------------------------------------------------
# Deterministic parameter init (torch-style layouts: conv [O,I,3,3], FC [O,I])
# ----------------------------------------------------------------------------
def init_anchor_net_params(key, in_channels=4, width=32, num_classes=10):
    ks = jax.random.split(key, 4)

    def he_conv(k, cout, cin):
        fan_in = cin * 9
        return jax.random.normal(k, (cout, cin, 3, 3), jnp.float32) * (2.0 / fan_in) ** 0.5

    def he_fc(k, cout, cin):
        return jax.random.normal(k, (cout, cin), jnp.float32) * (2.0 / cin) ** 0.5

    return {
        "stem_w": he_conv(ks[0], width, in_channels),
        "stem_b": jnp.zeros((width,), jnp.float32),
        "blk_w1": he_conv(ks[1], width, width),
        "blk_b1": jnp.zeros((width,), jnp.float32),
        "blk_w2": he_conv(ks[2], width, width),
        "blk_b2": jnp.zeros((width,), jnp.float32),
        "fc_w": he_fc(ks[3], num_classes, width),
        "fc_b": jnp.zeros((num_classes,), jnp.float32),
    }


# ----------------------------------------------------------------------------
# Pure-JAX f32 reference (used only for the self-check in __main__)
# ----------------------------------------------------------------------------
def _reference_forward(params, x):
    def conv(h, w, b):
        y = jax.lax.conv_general_dilated(
            h, w, window_strides=(1, 1), padding=((1, 1), (1, 1)),
            dimension_numbers=("NCHW", "OIHW", "NCHW"))
        return y + b[None, :, None, None]

    h = jax.nn.relu(conv(x, params["stem_w"], params["stem_b"]))
    r = jax.nn.relu(conv(h, params["blk_w1"], params["blk_b1"]))
    h = jax.nn.relu(conv(r, params["blk_w2"], params["blk_b2"]) + h)
    feat = jnp.mean(h, axis=(2, 3))
    logits = feat @ params["fc_w"].T + params["fc_b"]
    probs = jax.nn.softmax(logits, axis=1)
    return {"feat": feat, "logits": logits, "probs": probs}


if __name__ == "__main__":
    key = jax.random.PRNGKey(0)
    k_x, k_p = jax.random.split(key)

    batch, in_channels, spatial, num_classes, width = 2, 4, 16, 10, 32
    x = jax.random.normal(k_x, (batch, in_channels, spatial, spatial), jnp.float32)
    params = init_anchor_net_params(k_p, in_channels=in_channels,
                                    width=width, num_classes=num_classes)

    out = jax.jit(anchor_net_forward)(params, x)
    out = jax.block_until_ready(out)

    assert out["feat"].shape == (batch, width)
    assert out["logits"].shape == (batch, num_classes)
    assert out["probs"].shape == (batch, num_classes)
    row_sums = jnp.sum(out["probs"], axis=1)
    assert bool(jnp.all(jnp.abs(row_sums - 1.0) < 1e-4))

    ref = _reference_forward(params, x)
    for name in ("feat", "logits", "probs"):
        assert bool(jnp.allclose(out[name], ref[name], atol=5e-2, rtol=5e-2)), name

    print("KERNEL_OK")
</pallas_src>

<mosaic_0001>
module attributes {stable_mosaic.version = 11 : i64} {
  func.func @_anchor_fused_kernel(%arg0: i32, %arg1: memref<1x32x256xbf16, #tpu.memory_space<vmem>>, %arg2: memref<32x288xbf16, #tpu.memory_space<vmem>>, %arg3: memref<32x1xf32, #tpu.memory_space<vmem>>, %arg4: memref<32x288xbf16, #tpu.memory_space<vmem>>, %arg5: memref<32x1xf32, #tpu.memory_space<vmem>>, %arg6: memref<32x288xbf16, #tpu.memory_space<vmem>>, %arg7: memref<32x1xf32, #tpu.memory_space<vmem>>, %arg8: memref<32x10xf32, #tpu.memory_space<vmem>>, %arg9: memref<1x10xf32, #tpu.memory_space<vmem>>, %arg10: memref<1x1x32xf32, #tpu.memory_space<vmem>>, %arg11: memref<1x1x10xf32, #tpu.memory_space<vmem>>, %arg12: memref<1x1x10xf32, #tpu.memory_space<vmem>>, %arg13: memref<32x512xbf16, #tpu.memory_space<vmem>>) attributes {dimension_semantics = [#tpu.dimension_semantics<parallel>], iteration_bounds = array<i64: 2>, scalar_prefetch = 0 : i64, scratch_operands = 1 : i64, tpu.core_type = #tpu.core_type<tc>, window_params = [{transform_indices = @transform_0, window_bounds = array<i64: 1, 32, 256>}, {pipeline_mode = #tpu.pipeline_mode<synchronous>, transform_indices = @transform_1, window_bounds = array<i64: 32, 288>}, {pipeline_mode = #tpu.pipeline_mode<synchronous>, transform_indices = @transform_2, window_bounds = array<i64: 32, 1>}, {pipeline_mode = #tpu.pipeline_mode<synchronous>, transform_indices = @transform_3, window_bounds = array<i64: 32, 288>}, {pipeline_mode = #tpu.pipeline_mode<synchronous>, transform_indices = @transform_4, window_bounds = array<i64: 32, 1>}, {pipeline_mode = #tpu.pipeline_mode<synchronous>, transform_indices = @transform_5, window_bounds = array<i64: 32, 288>}, {pipeline_mode = #tpu.pipeline_mode<synchronous>, transform_indices = @transform_6, window_bounds = array<i64: 32, 1>}, {pipeline_mode = #tpu.pipeline_mode<synchronous>, transform_indices = @transform_7, window_bounds = array<i64: 32, 10>}, {pipeline_mode = #tpu.pipeline_mode<synchronous>, transform_indices = @transform_8, window_bounds = array<i64: 1, 10>}, {transform_indices = @transform_9, window_bounds = array<i64: 1, 1, 32>}, {transform_indices = @transform_10, window_bounds = array<i64: 1, 1, 10>}, {transform_indices = @transform_11, window_bounds = array<i64: 1, 1, 10>}]} {
    %0 = tpu.iota {dimensions = array<i32: 1>} : vector<1x256xi32>
    %c16_i32 = arith.constant 16 : i32
    %c0_i32 = arith.constant 0 : i32
    %1 = arith.cmpi eq, %c16_i32, %c0_i32 : i32
    %c1_i32 = arith.constant 1 : i32
    %2 = arith.select %1, %c1_i32, %c16_i32 : i32
    %3 = vector.broadcast %2 : i32 to vector<1x256xi32>
    %4 = arith.remsi %0, %3 : vector<1x256xi32>
    %c0_i32_0 = arith.constant 0 : i32
    %5 = vector.broadcast %c0_i32_0 : i32 to vector<1x256xi32>
    %6 = arith.cmpi ne, %4, %5 : vector<1x256xi32>
    %c0_i32_1 = arith.constant 0 : i32
    %7 = vector.broadcast %c0_i32_1 : i32 to vector<1x256xi32>
    %8 = arith.cmpi slt, %4, %7 : vector<1x256xi32>
    %c0_i32_2 = arith.constant 0 : i32
    %9 = arith.cmpi slt, %2, %c0_i32_2 : i32
    %10 = vector.broadcast %9 : i1 to vector<1x256xi1>
    %11 = vector.broadcast %10 : vector<1x256xi1> to vector<1x256xi1>
    %12 = arith.xori %8, %11 : vector<1x256xi1>
    %13 = arith.andi %12, %6 : vector<1x256xi1>
    %14 = vector.broadcast %2 : i32 to vector<1x256xi32>
    %15 = arith.addi %4, %14 : vector<1x256xi32>
    %16 = arith.select %13, %15, %4 : vector<1x256xi1>, vector<1x256xi32>
    %c1_i32_3 = arith.constant 1 : i32
    %17 = vector.broadcast %c1_i32_3 : i32 to vector<1x256xi32>
    %18 = arith.cmpi sge, %16, %17 : vector<1x256xi32>
    %c14_i32 = arith.constant 14 : i32
    %19 = vector.broadcast %c14_i32 : i32 to vector<1x256xi32>
    %20 = arith.cmpi sle, %16, %19 : vector<1x256xi32>
    %cst = arith.constant 0.000000e+00 : bf16
    %21 = vector.broadcast %cst : bf16 to vector<32x128xbf16>
    %c0 = arith.constant 0 : index
    %c0_4 = arith.constant 0 : index
    %22 = vector.load %arg13[%c0, %c0_4] : memref<32x512xbf16, #tpu.memory_space<vmem>>, vector<32x128xbf16>
    tpu.vector_store %arg13[%c0, %c0_4], %21 {strides = array<i32>} : memref<32x512xbf16, #tpu.memory_space<vmem>>, vector<32x128xbf16>,
    %c0_5 = arith.constant 0 : index
    %c384 = arith.constant 384 : index
    %23 = vector.load %arg13[%c0_5, %c384] : memref<32x512xbf16, #tpu.memory_space<vmem>>, vector<32x128xbf16>
    tpu.vector_store %arg13[%c0_5, %c384], %21 {strides = array<i32>} : memref<32x512xbf16, #tpu.memory_space<vmem>>, vector<32x128xbf16>,
    %c0_6 = arith.constant 0 : index
    %c0_7 = arith.constant 0 : index
    %c0_8 = arith.constant 0 : index
    %24 = vector.load %arg1[%c0_6, %c0_7, %c0_8] : memref<1x32x256xbf16, #tpu.memory_space<vmem>>, vector<1x32x256xbf16>
    %25 = vector.shape_cast %24 : vector<1x32x256xbf16> to vector<32x256xbf16>
    %c0_9 = arith.constant 0 : index
    %c128 = arith.constant 128 : index
    %26 = vector.load %arg13[%c0_9, %c128] : memref<32x512xbf16, #tpu.memory_space<vmem>>, vector<32x256xbf16>
    tpu.vector_store %arg13[%c0_9, %c128], %25 {strides = array<i32>} : memref<32x512xbf16, #tpu.memory_space<vmem>>, vector<32x256xbf16>,
    %c0_10 = arith.constant 0 : index
    %c111 = arith.constant 111 : index
    %27 = vector.load %arg13[%c0_10, %c111] : memref<32x512xbf16, #tpu.memory_space<vmem>>, vector<32x256xbf16>
    %cst_11 = arith.constant 0.000000e+00 : f32
    %28 = arith.truncf %cst_11 : f32 to bf16
    %29 = vector.shape_cast %18 : vector<1x256xi1> to vector<1x256xi1>
    %30 = vector.broadcast %29 : vector<1x256xi1> to vector<32x256xi1>
    %31 = vector.broadcast %28 : bf16 to vector<32x256xbf16>
    %32 = arith.select %30, %27, %31 : vector<32x256xi1>, vector<32x256xbf16>
    %c0_12 = arith.constant 0 : index
    %c112 = arith.constant 112 : index
    %33 = vector.load %arg13[%c0_12, %c112] : memref<32x512xbf16, #tpu.memory_space<vmem>>, vector<32x256xbf16>
    %c0_13 = arith.constant 0 : index
    %c113 = arith.constant 113 : index
    %34 = vector.load %arg13[%c0_13, %c113] : memref<32x512xbf16, #tpu.memory_space<vmem>>, vector<32x256xbf16>
    %cst_14 = arith.constant 0.000000e+00 : f32
    %35 = arith.truncf %cst_14 : f32 to bf16
    %36 = vector.shape_cast %20 : vector<1x256xi1> to vector<1x256xi1>
    %37 = vector.broadcast %36 : vector<1x256xi1> to vector<32x256xi1>
    %38 = vector.broadcast %35 : bf16 to vector<32x256xbf16>
    %39 = arith.select %37, %34, %38 : vector<32x256xi1>, vector<32x256xbf16>
    %c0_15 = arith.constant 0 : index
    %c127 = arith.constant 127 : index
    %40 = vector.load %arg13[%c0_15, %c127] : memref<32x512xbf16, #tpu.memory_space<vmem>>, vector<32x256xbf16>
    %cst_16 = arith.constant 0.000000e+00 : f32
    %41 = arith.truncf %cst_16 : f32 to bf16
    %42 = vector.shape_cast %18 : vector<1x256xi1> to vector<1x256xi1>
    %43 = vector.broadcast %42 : vector<1x256xi1> to vector<32x256xi1>
    %44 = vector.broadcast %41 : bf16 to vector<32x256xbf16>
    %45 = arith.select %43, %40, %44 : vector<32x256xi1>, vector<32x256xbf16>
    %c0_17 = arith.constant 0 : index
    %c128_18 = arith.constant 128 : index
    %46 = vector.load %arg13[%c0_17, %c128_18] : memref<32x512xbf16, #tpu.memory_space<vmem>>, vector<32x256xbf16>
    %c0_19 = arith.constant 0 : index
    %c129 = arith.constant 129 : index
    %47 = vector.load %arg13[%c0_19, %c129] : memref<32x512xbf16, #tpu.memory_space<vmem>>, vector<32x256xbf16>
    %cst_20 = arith.constant 0.000000e+00 : f32
    %48 = arith.truncf %cst_20 : f32 to bf16
    %49 = vector.shape_cast %20 : vector<1x256xi1> to vector<1x256xi1>
    %50 = vector.broadcast %49 : vector<1x256xi1> to vector<32x256xi1>
    %51 = vector.broadcast %48 : bf16 to vector<32x256xbf16>
    %52 = arith.select %50, %47, %51 : vector<32x256xi1>, vector<32x256xbf16>
    %c0_21 = arith.constant 0 : index
    %c143 = arith.constant 143 : index
    %53 = vector.load %arg13[%c0_21, %c143] : memref<32x512xbf16, #tpu.memory_space<vmem>>, vector<32x256xbf16>
    %cst_22 = arith.constant 0.000000e+00 : f32
    %54 = arith.truncf %cst_22 : f32 to bf16
    %55 = vector.shape_cast %18 : vector<1x256xi1> to vector<1x256xi1>
    %56 = vector.broadcast %55 : vector<1x256xi1> to vector<32x256xi1>
    %57 = vector.broadcast %54 : bf16 to vector<32x256xbf16>
    %58 = arith.select %56, %53, %57 : vector<32x256xi1>, vector<32x256xbf16>
    %c0_23 = arith.constant 0 : index
    %c144 = arith.constant 144 : index
    %59 = vector.load %arg13[%c0_23, %c144] : memref<32x512xbf16, #tpu.memory_space<vmem>>, vector<32x256xbf16>
    %c0_24 = arith.constant 0 : index
    %c145 = arith.constant 145 : index
    %60 = vector.load %arg13[%c0_24, %c145] : memref<32x512xbf16, #tpu.memory_space<vmem>>, vector<32x256xbf16>
    %cst_25 = arith.constant 0.000000e+00 : f32
    %61 = arith.truncf %cst_25 : f32 to bf16
    %62 = vector.shape_cast %20 : vector<1x256xi1> to vector<1x256xi1>
    %63 = vector.broadcast %62 : vector<1x256xi1> to vector<32x256xi1>
    %64 = vector.broadcast %61 : bf16 to vector<32x256xbf16>
    %65 = arith.select %63, %60, %64 : vector<32x256xi1>, vector<32x256xbf16>
    %66 = tpu.concatenate %32, %33, %39, %45, %46, %52, %58, %59, %65 in 0 : vector<32x256xbf16>, vector<32x256xbf16>, vector<32x256xbf16>, vector<32x256xbf16>, vector<32x256xbf16>, vector<32x256xbf16>, vector<32x256xbf16>, vector<32x256xbf16>, vector<32x256xbf16> -> vector<288x256xbf16>
    %c0_26 = arith.constant 0 : index
    %c0_27 = arith.constant 0 : index
    %67 = vector.load %arg2[%c0_26, %c0_27] : memref<32x288xbf16, #tpu.memory_space<vmem>>, vector<32x288xbf16>
    %cst_28 = arith.constant dense<0.000000e+00> : vector<32x256xf32>
    %68 = tpu.matmul %67, %66, %cst_28 {dimension_numbers = #tpu.dot_dimension_numbers<[1], [0], [0], [1], [0, 0, 1, 1], [], []>} : vector<32x288xbf16>, vector<288x256xbf16>, vector<32x256xf32> -> vector<32x256xf32>
    %c0_29 = arith.constant 0 : index
    %c0_30 = arith.constant 0 : index
    %69 = vector.load %arg3[%c0_29, %c0_30] : memref<32x1xf32, #tpu.memory_space<vmem>>, vector<32x1xf32>
    %70 = vector.broadcast %69 : vector<32x1xf32> to vector<32x256xf32>
    %71 = arith.addf %68, %70 : vector<32x256xf32>
    %cst_31 = arith.constant 0.000000e+00 : f32
    %72 = vector.broadcast %cst_31 : f32 to vector<32x256xf32>
    %73 = arith.maximumf %71, %72 : vector<32x256xf32>
    %74 = arith.truncf %73 : vector<32x256xf32> to vector<32x256xbf16>
    %c0_32 = arith.constant 0 : index
    %c128_33 = arith.constant 128 : index
    %75 = vector.load %arg13[%c0_32, %c128_33] : memref<32x512xbf16, #tpu.memory_space<vmem>>, vector<32x256xbf16>
    tpu.vector_store %arg13[%c0_32, %c128_33], %74 {strides = array<i32>} : memref<32x512xbf16, #tpu.memory_space<vmem>>, vector<32x256xbf16>,
    %c0_34 = arith.constant 0 : index
    %c111_35 = arith.constant 111 : index
    %76 = vector.load %arg13[%c0_34, %c111_35] : memref<32x512xbf16, #tpu.memory_space<vmem>>, vector<32x256xbf16>
    %cst_36 = arith.constant 0.000000e+00 : f32
    %77 = arith.truncf %cst_36 : f32 to bf16
    %78 = vector.shape_cast %18 : vector<1x256xi1> to vector<1x256xi1>
    %79 = vector.broadcast %78 : vector<1x256xi1> to vector<32x256xi1>
    %80 = vector.broadcast %77 : bf16 to vector<32x256xbf16>
    %81 = arith.select %79, %76, %80 : vector<32x256xi1>, vector<32x256xbf16>
    %c0_37 = arith.constant 0 : index
    %c112_38 = arith.constant 112 : index
    %82 = vector.load %arg13[%c0_37, %c112_38] : memref<32x512xbf16, #tpu.memory_space<vmem>>, vector<32x256xbf16>
    %c0_39 = arith.constant 0 : index
    %c113_40 = arith.constant 113 : index
    %83 = vector.load %arg13[%c0_39, %c113_40] : memref<32x512xbf16, #tpu.memory_space<vmem>>, vector<32x256xbf16>
    %cst_41 = arith.constant 0.000000e+00 : f32
    %84 = arith.truncf %cst_41 : f32 to bf16
    %85 = vector.shape_cast %20 : vector<1x256xi1> to vector<1x256xi1>
    %86 = vector.broadcast %85 : vector<1x256xi1> to vector<32x256xi1>
    %87 = vector.broadcast %84 : bf16 to vector<32x256xbf16>
    %88 = arith.select %86, %83, %87 : vector<32x256xi1>, vector<32x256xbf16>
    %c0_42 = arith.constant 0 : index
    %c127_43 = arith.constant 127 : index
    %89 = vector.load %arg13[%c0_42, %c127_43] : memref<32x512xbf16, #tpu.memory_space<vmem>>, vector<32x256xbf16>
    %cst_44 = arith.constant 0.000000e+00 : f32
    %90 = arith.truncf %cst_44 : f32 to bf16
    %91 = vector.shape_cast %18 : vector<1x256xi1> to vector<1x256xi1>
    %92 = vector.broadcast %91 : vector<1x256xi1> to vector<32x256xi1>
    %93 = vector.broadcast %90 : bf16 to vector<32x256xbf16>
    %94 = arith.select %92, %89, %93 : vector<32x256xi1>, vector<32x256xbf16>
    %c0_45 = arith.constant 0 : index
    %c128_46 = arith.constant 128 : index
    %95 = vector.load %arg13[%c0_45, %c128_46] : memref<32x512xbf16, #tpu.memory_space<vmem>>, vector<32x256xbf16>
    %c0_47 = arith.constant 0 : index
    %c129_48 = arith.constant 129 : index
    %96 = vector.load %arg13[%c0_47, %c129_48] : memref<32x512xbf16, #tpu.memory_space<vmem>>, vector<32x256xbf16>
    %cst_49 = arith.constant 0.000000e+00 : f32
    %97 = arith.truncf %cst_49 : f32 to bf16
    %98 = vector.shape_cast %20 : vector<1x256xi1> to vector<1x256xi1>
    %99 = vector.broadcast %98 : vector<1x256xi1> to vector<32x256xi1>
    %100 = vector.broadcast %97 : bf16 to vector<32x256xbf16>
    %101 = arith.select %99, %96, %100 : vector<32x256xi1>, vector<32x256xbf16>
    %c0_50 = arith.constant 0 : index
    %c143_51 = arith.constant 143 : index
    %102 = vector.load %arg13[%c0_50, %c143_51] : memref<32x512xbf16, #tpu.memory_space<vmem>>, vector<32x256xbf16>
    %cst_52 = arith.constant 0.000000e+00 : f32
    %103 = arith.truncf %cst_52 : f32 to bf16
    %104 = vector.shape_cast %18 : vector<1x256xi1> to vector<1x256xi1>
    %105 = vector.broadcast %104 : vector<1x256xi1> to vector<32x256xi1>
    %106 = vector.broadcast %103 : bf16 to vector<32x256xbf16>
    %107 = arith.select %105, %102, %106 : vector<32x256xi1>, vector<32x256xbf16>
    %c0_53 = arith.constant 0 : index
    %c144_54 = arith.constant 144 : index
    %108 = vector.load %arg13[%c0_53, %c144_54] : memref<32x512xbf16, #tpu.memory_space<vmem>>, vector<32x256xbf16>
    %c0_55 = arith.constant 0 : index
    %c145_56 = arith.constant 145 : index
    %109 = vector.load %arg13[%c0_55, %c145_56] : memref<32x512xbf16, #tpu.memory_space<vmem>>, vector<32x256xbf16>
    %cst_57 = arith.constant 0.000000e+00 : f32
    %110 = arith.truncf %cst_57 : f32 to bf16
    %111 = vector.shape_cast %20 : vector<1x256xi1> to vector<1x256xi1>
    %112 = vector.broadcast %111 : vector<1x256xi1> to vector<32x256xi1>
    %113 = vector.broadcast %110 : bf16 to vector<32x256xbf16>
    %114 = arith.select %112, %109, %113 : vector<32x256xi1>, vector<32x256xbf16>
    %115 = tpu.concatenate %81, %82, %88, %94, %95, %101, %107, %108, %114 in 0 : vector<32x256xbf16>, vector<32x256xbf16>, vector<32x256xbf16>, vector<32x256xbf16>, vector<32x256xbf16>, vector<32x256xbf16>, vector<32x256xbf16>, vector<32x256xbf16>, vector<32x256xbf16> -> vector<288x256xbf16>
    %c0_58 = arith.constant 0 : index
    %c0_59 = arith.constant 0 : index
    %116 = vector.load %arg4[%c0_58, %c0_59] : memref<32x288xbf16, #tpu.memory_space<vmem>>, vector<32x288xbf16>
    %cst_60 = arith.constant dense<0.000000e+00> : vector<32x256xf32>
    %117 = tpu.matmul %116, %115, %cst_60 {dimension_numbers = #tpu.dot_dimension_numbers<[1], [0], [0], [1], [0, 0, 1, 1], [], []>} : vector<32x288xbf16>, vector<288x256xbf16>, vector<32x256xf32> -> vector<32x256xf32>
    %c0_61 = arith.constant 0 : index
    %c0_62 = arith.constant 0 : index
    %118 = vector.load %arg5[%c0_61, %c0_62] : memref<32x1xf32, #tpu.memory_space<vmem>>, vector<32x1xf32>
    %119 = vector.broadcast %118 : vector<32x1xf32> to vector<32x256xf32>
    %120 = arith.addf %117, %119 : vector<32x256xf32>
    %cst_63 = arith.constant 0.000000e+00 : f32
    %121 = vector.broadcast %cst_63 : f32 to vector<32x256xf32>
    %122 = arith.maximumf %120, %121 : vector<32x256xf32>
    %123 = arith.truncf %122 : vector<32x256xf32> to vector<32x256xbf16>
    %c0_64 = arith.constant 0 : index
    %c128_65 = arith.constant 128 : index
    %124 = vector.load %arg13[%c0_64, %c128_65] : memref<32x512xbf16, #tpu.memory_space<vmem>>, vector<32x256xbf16>
    tpu.vector_store %arg13[%c0_64, %c128_65], %123 {strides = array<i32>} : memref<32x512xbf16, #tpu.memory_space<vmem>>, vector<32x256xbf16>,
    %c0_66 = arith.constant 0 : index
    %c111_67 = arith.constant 111 : index
    %125 = vector.load %arg13[%c0_66, %c111_67] : memref<32x512xbf16, #tpu.memory_space<vmem>>, vector<32x256xbf16>
    %cst_68 = arith.constant 0.000000e+00 : f32
    %126 = arith.truncf %cst_68 : f32 to bf16
    %127 = vector.shape_cast %18 : vector<1x256xi1> to vector<1x256xi1>
    %128 = vector.broadcast %127 : vector<1x256xi1> to vector<32x256xi1>
    %129 = vector.broadcast %126 : bf16 to vector<32x256xbf16>
    %130 = arith.select %128, %125, %129 : vector<32x256xi1>, vector<32x256xbf16>
    %c0_69 = arith.constant 0 : index
    %c112_70 = arith.constant 112 : index
    %131 = vector.load %arg13[%c0_69, %c112_70] : memref<32x512xbf16, #tpu.memory_space<vmem>>, vector<32x256xbf16>
    %c0_71 = arith.constant 0 : index
    %c113_72 = arith.constant 113 : index
    %132 = vector.load %arg13[%c0_71, %c113_72] : memref<32x512xbf16, #tpu.memory_space<vmem>>, vector<32x256xbf16>
    %cst_73 = arith.constant 0.000000e+00 : f32
    %133 = arith.truncf %cst_73 : f32 to bf16
    %134 = vector.shape_cast %20 : vector<1x256xi1> to vector<1x256xi1>
    %135 = vector.broadcast %134 : vector<1x256xi1> to vector<32x256xi1>
    %136 = vector.broadcast %133 : bf16 to vector<32x256xbf16>
    %137 = arith.select %135, %132, %136 : vector<32x256xi1>, vector<32x256xbf16>
    %c0_74 = arith.constant 0 : index
    %c127_75 = arith.constant 127 : index
    %138 = vector.load %arg13[%c0_74, %c127_75] : memref<32x512xbf16, #tpu.memory_space<vmem>>, vector<32x256xbf16>
    %cst_76 = arith.constant 0.000000e+00 : f32
    %139 = arith.truncf %cst_76 : f32 to bf16
    %140 = vector.shape_cast %18 : vector<1x256xi1> to vector<1x256xi1>
    %141 = vector.broadcast %140 : vector<1x256xi1> to vector<32x256xi1>
    %142 = vector.broadcast %139 : bf16 to vector<32x256xbf16>
    %143 = arith.select %141, %138, %142 : vector<32x256xi1>, vector<32x256xbf16>
    %c0_77 = arith.constant 0 : index
    %c128_78 = arith.constant 128 : index
    %144 = vector.load %arg13[%c0_77, %c128_78] : memref<32x512xbf16, #tpu.memory_space<vmem>>, vector<32x256xbf16>
    %c0_79 = arith.constant 0 : index
    %c129_80 = arith.constant 129 : index
    %145 = vector.load %arg13[%c0_79, %c129_80] : memref<32x512xbf16, #tpu.memory_space<vmem>>, vector<32x256xbf16>
    %cst_81 = arith.constant 0.000000e+00 : f32
    %146 = arith.truncf %cst_81 : f32 to bf16
    %147 = vector.shape_cast %20 : vector<1x256xi1> to vector<1x256xi1>
    %148 = vector.broadcast %147 : vector<1x256xi1> to vector<32x256xi1>
    %149 = vector.broadcast %146 : bf16 to vector<32x256xbf16>
    %150 = arith.select %148, %145, %149 : vector<32x256xi1>, vector<32x256xbf16>
    %c0_82 = arith.constant 0 : index
    %c143_83 = arith.constant 143 : index
    %151 = vector.load %arg13[%c0_82, %c143_83] : memref<32x512xbf16, #tpu.memory_space<vmem>>, vector<32x256xbf16>
    %cst_84 = arith.constant 0.000000e+00 : f32
    %152 = arith.truncf %cst_84 : f32 to bf16
    %153 = vector.shape_cast %18 : vector<1x256xi1> to vector<1x256xi1>
    %154 = vector.broadcast %153 : vector<1x256xi1> to vector<32x256xi1>
    %155 = vector.broadcast %152 : bf16 to vector<32x256xbf16>
    %156 = arith.select %154, %151, %155 : vector<32x256xi1>, vector<32x256xbf16>
    %c0_85 = arith.constant 0 : index
    %c144_86 = arith.constant 144 : index
    %157 = vector.load %arg13[%c0_85, %c144_86] : memref<32x512xbf16, #tpu.memory_space<vmem>>, vector<32x256xbf16>
    %c0_87 = arith.constant 0 : index
    %c145_88 = arith.constant 145 : index
    %158 = vector.load %arg13[%c0_87, %c145_88] : memref<32x512xbf16, #tpu.memory_space<vmem>>, vector<32x256xbf16>
    %cst_89 = arith.constant 0.000000e+00 : f32
    %159 = arith.truncf %cst_89 : f32 to bf16
    %160 = vector.shape_cast %20 : vector<1x256xi1> to vector<1x256xi1>
    %161 = vector.broadcast %160 : vector<1x256xi1> to vector<32x256xi1>
    %162 = vector.broadcast %159 : bf16 to vector<32x256xbf16>
    %163 = arith.select %161, %158, %162 : vector<32x256xi1>, vector<32x256xbf16>
    %164 = tpu.concatenate %130, %131, %137, %143, %144, %150, %156, %157, %163 in 0 : vector<32x256xbf16>, vector<32x256xbf16>, vector<32x256xbf16>, vector<32x256xbf16>, vector<32x256xbf16>, vector<32x256xbf16>, vector<32x256xbf16>, vector<32x256xbf16>, vector<32x256xbf16> -> vector<288x256xbf16>
    %c0_90 = arith.constant 0 : index
    %c0_91 = arith.constant 0 : index
    %165 = vector.load %arg6[%c0_90, %c0_91] : memref<32x288xbf16, #tpu.memory_space<vmem>>, vector<32x288xbf16>
    %cst_92 = arith.constant dense<0.000000e+00> : vector<32x256xf32>
    %166 = tpu.matmul %165, %164, %cst_92 {dimension_numbers = #tpu.dot_dimension_numbers<[1], [0], [0], [1], [0, 0, 1, 1], [], []>} : vector<32x288xbf16>, vector<288x256xbf16>, vector<32x256xf32> -> vector<32x256xf32>
    %c0_93 = arith.constant 0 : index
    %c0_94 = arith.constant 0 : index
    %167 = vector.load %arg7[%c0_93, %c0_94] : memref<32x1xf32, #tpu.memory_space<vmem>>, vector<32x1xf32>
    %168 = vector.broadcast %167 : vector<32x1xf32> to vector<32x256xf32>
    %169 = arith.addf %166, %168 : vector<32x256xf32>
    %170 = arith.addf %169, %73 : vector<32x256xf32>
    %cst_95 = arith.constant 0.000000e+00 : f32
    %171 = vector.broadcast %cst_95 : f32 to vector<32x256xf32>
    %172 = arith.maximumf %170, %171 : vector<32x256xf32>
    %cst_96 = arith.constant dense<0.000000e+00> : vector<32xf32>
    %173 = vector.multi_reduction <add>, %172, %cst_96 [1] : vector<32x256xf32> to vector<32xf32>
    %174 = vector.shape_cast %173 : vector<32xf32> to vector<32x1xf32>
    %cst_97 = arith.constant 2.560000e+02 : f32
    %175 = vector.broadcast %cst_97 : f32 to vector<32x1xf32>
    %176 = arith.divf %174, %175 : vector<32x1xf32>
    %177 = tpu.iota {dimensions = array<i32: 0>} : vector<32x32xi32>
    %178 = tpu.iota {dimensions = array<i32: 1>} : vector<32x32xi32>
    %179 = arith.cmpi eq, %177, %178 : vector<32x32xi32>
    %cst_98 = arith.constant 0.000000e+00 : f32
    %180 = vector.shape_cast %176 : vector<32x1xf32> to vector<32x1xf32>
    %181 = vector.broadcast %180 : vector<32x1xf32> to vector<32x32xf32>
    %182 = vector.broadcast %cst_98 : f32 to vector<32x32xf32>
    %183 = arith.select %179, %181, %182 : vector<32x32xi1>, vector<32x32xf32>
    %cst_99 = arith.constant dense<0.000000e+00> : vector<32xf32>
    %184 = vector.multi_reduction <add>, %183, %cst_99 [0] : vector<32x32xf32> to vector<32xf32>
    %185 = vector.shape_cast %184 : vector<32xf32> to vector<1x32xf32>
    %c0_100 = arith.constant 0 : index
    %c0_101 = arith.constant 0 : index
    %c0_102 = arith.constant 0 : index
    %186 = vector.load %arg10[%c0_100, %c0_101, %c0_102] : memref<1x1x32xf32, #tpu.memory_space<vmem>>, vector<1x1x32xf32>
    %187 = vector.shape_cast %186 : vector<1x1x32xf32> to vector<1x32xf32>
    %188 = vector.shape_cast %185 : vector<1x32xf32> to vector<1x1x32xf32>
    tpu.vector_store %arg10[%c0_100, %c0_101, %c0_102], %188 {strides = array<i32>} : memref<1x1x32xf32, #tpu.memory_space<vmem>>, vector<1x1x32xf32>,
    %c0_103 = arith.constant 0 : index
    %c0_104 = arith.constant 0 : index
    %189 = vector.load %arg8[%c0_103, %c0_104] : memref<32x10xf32, #tpu.memory_space<vmem>>, vector<32x10xf32>
    %190 = vector.broadcast %176 : vector<32x1xf32> to vector<32x10xf32>
    %191 = arith.mulf %189, %190 : vector<32x10xf32>
    %cst_105 = arith.constant dense<0.000000e+00> : vector<10xf32>
    %192 = vector.multi_reduction <add>, %191, %cst_105 [0] : vector<32x10xf32> to vector<10xf32>
    %193 = vector.shape_cast %192 : vector<10xf32> to vector<1x10xf32>
    %c0_106 = arith.constant 0 : index
    %c0_107 = arith.constant 0 : index
    %194 = vector.load %arg9[%c0_106, %c0_107] : memref<1x10xf32, #tpu.memory_space<vmem>>, vector<1x10xf32>
    %195 = arith.addf %193, %194 : vector<1x10xf32>
    %c0_108 = arith.constant 0 : index
    %c0_109 = arith.constant 0 : index
    %c0_110 = arith.constant 0 : index
    %196 = vector.load %arg11[%c0_108, %c0_109, %c0_110] : memref<1x1x10xf32, #tpu.memory_space<vmem>>, vector<1x1x10xf32>
    %197 = vector.shape_cast %196 : vector<1x1x10xf32> to vector<1x10xf32>
    %198 = vector.shape_cast %195 : vector<1x10xf32> to vector<1x1x10xf32>
    tpu.vector_store %arg11[%c0_108, %c0_109, %c0_110], %198 {strides = array<i32>} : memref<1x1x10xf32, #tpu.memory_space<vmem>>, vector<1x1x10xf32>,
    %cst_111 = arith.constant dense<0xFF800000> : vector<1xf32>
    %199 = vector.multi_reduction <maximumf>, %195, %cst_111 [1] : vector<1x10xf32> to vector<1xf32>
    %200 = vector.shape_cast %199 : vector<1xf32> to vector<1x1xf32>
    %201 = vector.broadcast %200 : vector<1x1xf32> to vector<1x10xf32>
    %202 = arith.subf %195, %201 : vector<1x10xf32>
    %203 = math.exp %202 : vector<1x10xf32>
    %cst_112 = arith.constant dense<0.000000e+00> : vector<1xf32>
    %204 = vector.multi_reduction <add>, %203, %cst_112 [1] : vector<1x10xf32> to vector<1xf32>
    %205 = vector.shape_cast %204 : vector<1xf32> to vector<1x1xf32>
    %206 = vector.broadcast %205 : vector<1x1xf32> to vector<1x10xf32>
    %207 = arith.divf %203, %206 : vector<1x10xf32>
    %c0_113 = arith.constant 0 : index
    %c0_114 = arith.constant 0 : index
    %c0_115 = arith.constant 0 : index
    %208 = vector.load %arg12[%c0_113, %c0_114, %c0_115] : memref<1x1x10xf32, #tpu.memory_space<vmem>>, vector<1x1x10xf32>
    %209 = vector.shape_cast %208 : vector<1x1x10xf32> to vector<1x10xf32>
    %210 = vector.shape_cast %207 : vector<1x10xf32> to vector<1x1x10xf32>
    tpu.vector_store %arg12[%c0_113, %c0_114, %c0_115], %210 {strides = array<i32>} : memref<1x1x10xf32, #tpu.memory_space<vmem>>, vector<1x1x10xf32>,
    return
  }
  func.func @transform_0(%arg0: i32) -> (i32, i32, i32) {
    %c0_i32 = arith.constant 0 : i32
    %c0_i32_0 = arith.constant 0 : i32
    %c0_i32_1 = arith.constant 0 : i32
    return %arg0, %c0_i32, %c0_i32_0 : i32, i32, i32
  }
  func.func @transform_1(%arg0: i32) -> (i32, i32) {
    %c0_i32 = arith.constant 0 : i32
    %c0_i32_0 = arith.constant 0 : i32
    %c0_i32_1 = arith.constant 0 : i32
    return %c0_i32, %c0_i32_0 : i32, i32
  }
  func.func @transform_2(%arg0: i32) -> (i32, i32) {
    %c0_i32 = arith.constant 0 : i32
    %c0_i32_0 = arith.constant 0 : i32
    %c0_i32_1 = arith.constant 0 : i32
    return %c0_i32, %c0_i32_0 : i32, i32
  }
  func.func @transform_3(%arg0: i32) -> (i32, i32) {
    %c0_i32 = arith.constant 0 : i32
    %c0_i32_0 = arith.constant 0 : i32
    %c0_i32_1 = arith.constant 0 : i32
    return %c0_i32, %c0_i32_0 : i32, i32
  }
  func.func @transform_4(%arg0: i32) -> (i32, i32) {
    %c0_i32 = arith.constant 0 : i32
    %c0_i32_0 = arith.constant 0 : i32
    %c0_i32_1 = arith.constant 0 : i32
    return %c0_i32, %c0_i32_0 : i32, i32
  }
  func.func @transform_5(%arg0: i32) -> (i32, i32) {
    %c0_i32 = arith.constant 0 : i32
    %c0_i32_0 = arith.constant 0 : i32
    %c0_i32_1 = arith.constant 0 : i32
    return %c0_i32, %c0_i32_0 : i32, i32
  }
  func.func @transform_6(%arg0: i32) -> (i32, i32) {
    %c0_i32 = arith.constant 0 : i32
    %c0_i32_0 = arith.constant 0 : i32
    %c0_i32_1 = arith.constant 0 : i32
    return %c0_i32, %c0_i32_0 : i32, i32
  }
  func.func @transform_7(%arg0: i32) -> (i32, i32) {
    %c0_i32 = arith.constant 0 : i32
    %c0_i32_0 = arith.constant 0 : i32
    %c0_i32_1 = arith.constant 0 : i32
    return %c0_i32, %c0_i32_0 : i32, i32
  }
  func.func @transform_8(%arg0: i32) -> (i32, i32) {
    %c0_i32 = arith.constant 0 : i32
    %c0_i32_0 = arith.constant 0 : i32
    %c0_i32_1 = arith.constant 0 : i32
    return %c0_i32, %c0_i32_0 : i32, i32
  }
  func.func @transform_9(%arg0: i32) -> (i32, i32, i32) {
    %c0_i32 = arith.constant 0 : i32
    %c0_i32_0 = arith.constant 0 : i32
    %c0_i32_1 = arith.constant 0 : i32
    return %arg0, %c0_i32, %c0_i32_0 : i32, i32, i32
  }
  func.func @transform_10(%arg0: i32) -> (i32, i32, i32) {
    %c0_i32 = arith.constant 0 : i32
    %c0_i32_0 = arith.constant 0 : i32
    %c0_i32_1 = arith.constant 0 : i32
    return %arg0, %c0_i32, %c0_i32_0 : i32, i32, i32
  }
  func.func @transform_11(%arg0: i32) -> (i32, i32, i32) {
    %c0_i32 = arith.constant 0 : i32
    %c0_i32_0 = arith.constant 0 : i32
    %c0_i32_1 = arith.constant 0 : i32
    return %arg0, %c0_i32, %c0_i32_0 : i32, i32, i32
  }
}

</mosaic_0001>

<llo_original>
// kernel: anchor_net_forward.1
$region0: #{anchor_net_forward.1}
  #allocation0 [shape = 'u32[]', space=smem, size = 0x4, offset = 0x4, fixed_abs, tag = 'smem constant byte address 0x4 - core index']
  #allocation1 [shape = 'u32[144,128]{1,0:T(1,128)}', space=vmem, size = 0x12000, scoped, tag = 'internal scratch']
  #allocation2 [shape = 'bf16[32,512]{1,0:T(16,128)(2,1)}', space=vmem, size = 0x8000, scoped, tag = 'scratch operand']
  %s0 = inlined_call_operand.vmem [shape: bf16[2,32,256], index: 0, kind: input, shape index: {}]
  %s1 = inlined_call_operand.vmem [shape: bf16[32,288], index: 1, kind: input, shape index: {}]
  %s2 = inlined_call_operand.vmem [shape: f32[32,1], index: 2, kind: input, shape index: {}]
  %s3 = inlined_call_operand.vmem [shape: bf16[32,288], index: 3, kind: input, shape index: {}]
  %s4 = inlined_call_operand.vmem [shape: f32[32,1], index: 4, kind: input, shape index: {}]
  %s5 = inlined_call_operand.vmem [shape: bf16[32,288], index: 5, kind: input, shape index: {}]
  %s6 = inlined_call_operand.vmem [shape: f32[32,1], index: 6, kind: input, shape index: {}]
  %s7 = inlined_call_operand.vmem [shape: f32[32,10], index: 7, kind: input, shape index: {}]
  %s8 = inlined_call_operand.vmem [shape: f32[1,10], index: 8, kind: input, shape index: {}]
  %s9 = inlined_call_operand.hbm [shape: f32[2,1,32], index: 9, kind: output, shape index: {0}]
  %s10 = inlined_call_operand.hbm [shape: f32[2,1,10], index: 10, kind: output, shape index: {1}]
  %s11 = inlined_call_operand.hbm [shape: f32[2,1,10], index: 11, kind: output, shape index: {2}]
  %12 = xla_tuple %s9, %s10, %s11
  %s13 = sld [smem:[#allocation0]]
  $region85: #{anchor_net_forward.1} parent=0
    _
  %s15 = ssub.s32 1, %s13
  %s16 = scalar_select 0, %s15, %s13
  $region1: #{anchor_net_forward.1} parent=0
    #allocation3 [shape = 'u8[1024]{0}', space=vmem, size = 0x400, scoped, tag = 'output window, operand 0']
    #allocation4 [shape = 's32[2]{0}', space=sflag, size = 0x8, scoped, tag = 'scoped memory for anchor_net_forward.1']
    #allocation5 [shape = 'u8[1024]{0}', space=vmem, size = 0x400, scoped, tag = 'output window, operand 1']
    #allocation6 [shape = 's32[2]{0}', space=sflag, size = 0x8, scoped, tag = 'scoped memory for anchor_net_forward.1']
    #allocation7 [shape = 'u8[1024]{0}', space=vmem, size = 0x400, scoped, tag = 'output window, operand 2']
    %17 = vsyncpa [#allocation4], 0
    %s18 = scalar_lea.sflag [#allocation4], 1
    %19 = vsyncpa %s18, 0
    %20 = vsyncpa [#allocation6], 0
    %s21 = scalar_lea.sflag [#allocation6], 1
    %22 = vsyncpa %s21, 0
    loop: start=0, step=1, limit=4
    $region2: #{anchor_net_forward.1} parent=1 // loop_pre_header
      _
    $region3: #{anchor_net_forward.1} parent=1 // loop_header
      %s24 = sphi 0, %s28
      %p25 = scmp.ge.s32.totalorder %s24, 4
      %s34 = sphi 0, %s36
      %s37 = sphi 0, %s34
      %s38 = sphi 0, %s37
      %s54 = sphi 0, %s38
      %s58 = sphi 0, %s58
      %s60 = sphi 0, %s58
      %s61 = sphi 0, %s60
      %s75 = sphi 0, %s61
      %s79 = sphi 0, %s79
      %s81 = sphi 0, %s79
      %s82 = sphi 0, %s81
      %s96 = sphi 0, %s82
      %s100 = sphi 0, %s100
      %s102 = sphi 0, %s100
      %s103 = sphi 0, %s102
      %s117 = sphi 0, %s103
      %s121 = sphi 0, %s121
      %s123 = sphi 0, %s121
      %s124 = sphi 0, %s123
      %s138 = sphi 0, %s124
      %s142 = sphi 0, %s142
      %s144 = sphi 0, %s142
      %s145 = sphi 0, %s144
      %s159 = sphi 0, %s145
      %s163 = sphi 0, %s163
      %s165 = sphi 0, %s163
      %s166 = sphi 0, %s165
      %s180 = sphi 0, %s166
      %s184 = sphi 0, %s184
      %s186 = sphi 0, %s184
      %s187 = sphi 0, %s186
      %s201 = sphi 0, %s187
      %s205 = sphi 0, %s205
      %s207 = sphi 0, %s205
      %s208 = sphi 0, %s207
      %s222 = sphi 0, %s208
      %s228 = sphi 0, %s230
      %s231 = sphi 0, %s228
      %s232 = sphi 0, %s231
      %s248 = sphi 0, %s232
      %s254 = sphi 0, %s256
      %s257 = sphi 0, %s254
      %s258 = sphi 0, %s257
      %s274 = sphi 0, %s258
      %s280 = sphi 0, %s282
      %s283 = sphi 0, %s280
      %s284 = sphi 0, %s283
      %s300 = sphi 0, %s284
    $region4: #{anchor_net_forward.1} parent=1 // loop_header_branch
      %27 = sbr.rel (%p25) target = $region8
    $region5: #{anchor_net_forward.1} parent=1 // loop_body
      %s29 = ssub.s32 %s24, 1
      %s30 = ssub.s32 %s24, 2
      %s31 = sadd.s32 %s24, 1
      %s32 = ssub.s32 %s24, %s31
      %p33 = scmp.eq.s32.totalorder %s32, 0
      %s35 = sadd.s32 %s34, 1
      %s36 = scalar_select %p33, %s34, %s35
      %p39 = pneg %p33
      %p40 = scmp.eq.s32.totalorder %s24, 1
      %p41 = por %p39, %p40
      %p42 = scmp.ne.s32.totalorder %s34, %s37
      %p43 = scmp.eq.s32.totalorder %s24, 0
      %p44 = por %p42, %p43
      %p45 = scmp.ne.s32.totalorder %s34, %s37
      %p46 = scmp.eq.s32.totalorder %s29, 1
      %p47 = por %p45, %p46
      %p48 = scmp.ne.s32.totalorder %s37, %s38
      %p49 = scmp.eq.s32.totalorder %s29, 0
      %p50 = por %p48, %p49
      %p51 = scmp.ne.s32.totalorder %s37, %s38
      %p52 = scmp.eq.s32.totalorder %s30, 1
      %p53 = por %p51, %p52
      %p55 = scmp.ne.s32.totalorder %s38, %s54
      %p56 = scmp.eq.s32.totalorder %s30, 0
      %p57 = por %p55, %p56
      %s59 = sadd.s32 %s58, 1
      %p62 = scmp.eq.s32.totalorder %s24, 1
      %p63 = scmp.ne.s32.totalorder %s58, %s60
      %p64 = scmp.eq.s32.totalorder %s24, 0
      %p65 = por %p63, %p64
      %p66 = scmp.ne.s32.totalorder %s58, %s60
      %p67 = scmp.eq.s32.totalorder %s29, 1
      %p68 = por %p66, %p67
      %p69 = scmp.ne.s32.totalorder %s60, %s61
      %p70 = scmp.eq.s32.totalorder %s29, 0
      %p71 = por %p69, %p70
      %p72 = scmp.ne.s32.totalorder %s60, %s61
      %p73 = scmp.eq.s32.totalorder %s30, 1
      %p74 = por %p72, %p73
      %p76 = scmp.ne.s32.totalorder %s61, %s75
      %p77 = scmp.eq.s32.totalorder %s30, 0
      %p78 = por %p76, %p77
      %s80 = sadd.s32 %s79, 1
      %p83 = scmp.eq.s32.totalorder %s24, 1
      %p84 = scmp.ne.s32.totalorder %s79, %s81
      %p85 = scmp.eq.s32.totalorder %s24, 0
      %p86 = por %p84, %p85
      %p87 = scmp.ne.s32.totalorder %s79, %s81
      %p88 = scmp.eq.s32.totalorder %s29, 1
      %p89 = por %p87, %p88
      %p90 = scmp.ne.s32.totalorder %s81, %s82
      %p91 = scmp.eq.s32.totalorder %s29, 0
      %p92 = por %p90, %p91
      %p93 = scmp.ne.s32.totalorder %s81, %s82
      %p94 = scmp.eq.s32.totalorder %s30, 1
      %p95 = por %p93, %p94
      %p97 = scmp.ne.s32.totalorder %s82, %s96
      %p98 = scmp.eq.s32.totalorder %s30, 0
      %p99 = por %p97, %p98
      %s101 = sadd.s32 %s100, 1
      %p104 = scmp.eq.s32.totalorder %s24, 1
      %p105 = scmp.ne.s32.totalorder %s100, %s102
      %p106 = scmp.eq.s32.totalorder %s24, 0
      %p107 = por %p105, %p106
      %p108 = scmp.ne.s32.totalorder %s100, %s102
      %p109 = scmp.eq.s32.totalorder %s29, 1
      %p110 = por %p108, %p109
      %p111 = scmp.ne.s32.totalorder %s102, %s103
      %p112 = scmp.eq.s32.totalorder %s29, 0
      %p113 = por %p111, %p112
      %p114 = scmp.ne.s32.totalorder %s102, %s103
      %p115 = scmp.eq.s32.totalorder %s30, 1
      %p116 = por %p114, %p115
      %p118 = scmp.ne.s32.totalorder %s103, %s117
      %p119 = scmp.eq.s32.totalorder %s30, 0
      %p120 = por %p118, %p119
      %s122 = sadd.s32 %s121, 1
      %p125 = scmp.eq.s32.totalorder %s24, 1
      %p126 = scmp.ne.s32.totalorder %s121, %s123
      %p127 = scmp.eq.s32.totalorder %s24, 0
      %p128 = por %p126, %p127
      %p129 = scmp.ne.s32.totalorder %s121, %s123
      %p130 = scmp.eq.s32.totalorder %s29, 1
      %p131 = por %p129, %p130
      %p132 = scmp.ne.s32.totalorder %s123, %s124
      %p133 = scmp.eq.s32.totalorder %s29, 0
      %p134 = por %p132, %p133
      %p135 = scmp.ne.s32.totalorder %s123, %s124
      %p136 = scmp.eq.s32.totalorder %s30, 1
      %p137 = por %p135, %p136
      %p139 = scmp.ne.s32.totalorder %s124, %s138
      %p140 = scmp.eq.s32.totalorder %s30, 0
      %p141 = por %p139, %p140
      %s143 = sadd.s32 %s142, 1
      %p146 = scmp.eq.s32.totalorder %s24, 1
      %p147 = scmp.ne.s32.totalorder %s142, %s144
      %p148 = scmp.eq.s32.totalorder %s24, 0
      %p149 = por %p147, %p148
      %p150 = scmp.ne.s32.totalorder %s142, %s144
      %p151 = scmp.eq.s32.totalorder %s29, 1
      %p152 = por %p150, %p151
      %p153 = scmp.ne.s32.totalorder %s144, %s145
      %p154 = scmp.eq.s32.totalorder %s29, 0
      %p155 = por %p153, %p154
      %p156 = scmp.ne.s32.totalorder %s144, %s145
      %p157 = scmp.eq.s32.totalorder %s30, 1
      %p158 = por %p156, %p157
      %p160 = scmp.ne.s32.totalorder %s145, %s159
      %p161 = scmp.eq.s32.totalorder %s30, 0
      %p162 = por %p160, %p161
      %s164 = sadd.s32 %s163, 1
      %p167 = scmp.eq.s32.totalorder %s24, 1
      %p168 = scmp.ne.s32.totalorder %s163, %s165
      %p169 = scmp.eq.s32.totalorder %s24, 0
      %p170 = por %p168, %p169
      %p171 = scmp.ne.s32.totalorder %s163, %s165
      %p172 = scmp.eq.s32.totalorder %s29, 1
      %p173 = por %p171, %p172
      %p174 = scmp.ne.s32.totalorder %s165, %s166
      %p175 = scmp.eq.s32.totalorder %s29, 0
      %p176 = por %p174, %p175
      %p177 = scmp.ne.s32.totalorder %s165, %s166
      %p178 = scmp.eq.s32.totalorder %s30, 1
      %p179 = por %p177, %p178
      %p181 = scmp.ne.s32.totalorder %s166, %s180
      %p182 = scmp.eq.s32.totalorder %s30, 0
      %p183 = por %p181, %p182
      %s185 = sadd.s32 %s184, 1
      %p188 = scmp.eq.s32.totalorder %s24, 1
      %p189 = scmp.ne.s32.totalorder %s184, %s186
      %p190 = scmp.eq.s32.totalorder %s24, 0
      %p191 = por %p189, %p190
      %p192 = scmp.ne.s32.totalorder %s184, %s186
      %p193 = scmp.eq.s32.totalorder %s29, 1
      %p194 = por %p192, %p193
      %p195 = scmp.ne.s32.totalorder %s186, %s187
      %p196 = scmp.eq.s32.totalorder %s29, 0
      %p197 = por %p195, %p196
      %p198 = scmp.ne.s32.totalorder %s186, %s187
      %p199 = scmp.eq.s32.totalorder %s30, 1
      %p200 = por %p198, %p199
      %p202 = scmp.ne.s32.totalorder %s187, %s201
      %p203 = scmp.eq.s32.totalorder %s30, 0
      %p204 = por %p202, %p203
      %s206 = sadd.s32 %s205, 1
      %p209 = scmp.eq.s32.totalorder %s24, 1
      %p210 = scmp.ne.s32.totalorder %s205, %s207
      %p211 = scmp.eq.s32.totalorder %s24, 0
      %p212 = por %p210, %p211
      %p213 = scmp.ne.s32.totalorder %s205, %s207
      %p214 = scmp.eq.s32.totalorder %s29, 1
      %p215 = por %p213, %p214
      %p216 = scmp.ne.s32.totalorder %s207, %s208
      %p217 = scmp.eq.s32.totalorder %s29, 0
      %p218 = por %p216, %p217
      %p219 = scmp.ne.s32.totalorder %s207, %s208
      %p220 = scmp.eq.s32.totalorder %s30, 1
      %p221 = por %p219, %p220
      %p223 = scmp.ne.s32.totalorder %s208, %s222
      %p224 = scmp.eq.s32.totalorder %s30, 0
      %p225 = por %p223, %p224
      %s226 = ssub.s32 %s24, %s31
      %p227 = scmp.eq.s32.totalorder %s226, 0
      %s229 = sadd.s32 %s228, 1
      %s230 = scalar_select %p227, %s228, %s229
      %p233 = pneg %p227
      %p234 = scmp.eq.s32.totalorder %s24, 1
      %p235 = por %p233, %p234
      %p236 = scmp.ne.s32.totalorder %s228, %s231
      %p237 = scmp.eq.s32.totalorder %s24, 0
      %p238 = por %p236, %p237
      %p239 = scmp.ne.s32.totalorder %s228, %s231
      %p240 = scmp.eq.s32.totalorder %s29, 1
      %p241 = por %p239, %p240
      %p242 = scmp.ne.s32.totalorder %s231, %s232
      %p243 = scmp.eq.s32.totalorder %s29, 0
      %p244 = por %p242, %p243
      %p245 = scmp.ne.s32.totalorder %s231, %s232
      %p246 = scmp.eq.s32.totalorder %s30, 1
      %p247 = por %p245, %p246
      %p249 = scmp.ne.s32.totalorder %s232, %s248
      %p250 = scmp.eq.s32.totalorder %s30, 0
      %p251 = por %p249, %p250
      %s252 = ssub.s32 %s24, %s31
      %p253 = scmp.eq.s32.totalorder %s252, 0
      %s255 = sadd.s32 %s254, 1
      %s256 = scalar_select %p253, %s254, %s255
      %p259 = pneg %p253
      %p260 = scmp.eq.s32.totalorder %s24, 1
      %p261 = por %p259, %p260
      %p262 = scmp.ne.s32.totalorder %s254, %s257
      %p263 = scmp.eq.s32.totalorder %s24, 0
      %p264 = por %p262, %p263
      %p265 = scmp.ne.s32.totalorder %s254, %s257
      %p266 = scmp.eq.s32.totalorder %s29, 1
      %p267 = por %p265, %p266
      %p268 = scmp.ne.s32.totalorder %s257, %s258
      %p269 = scmp.eq.s32.totalorder %s29, 0
      %p270 = por %p268, %p269
      %p271 = scmp.ne.s32.totalorder %s257, %s258
      %p272 = scmp.eq.s32.totalorder %s30, 1
      %p273 = por %p271, %p272
      %p275 = scmp.ne.s32.totalorder %s258, %s274
      %p276 = scmp.eq.s32.totalorder %s30, 0
      %p277 = por %p275, %p276
      %s278 = ssub.s32 %s24, %s31
      %p279 = scmp.eq.s32.totalorder %s278, 0
      %s281 = sadd.s32 %s280, 1
      %s282 = scalar_select %p279, %s280, %s281
      %p285 = pneg %p279
      %p286 = scmp.eq.s32.totalorder %s24, 1
      %p287 = por %p285, %p286
      %p288 = scmp.ne.s32.totalorder %s280, %s283
      %p289 = scmp.eq.s32.totalorder %s24, 0
      %p290 = por %p288, %p289
      %p291 = scmp.ne.s32.totalorder %s280, %s283
      %p292 = scmp.eq.s32.totalorder %s29, 1
      %p293 = por %p291, %p292
      %p294 = scmp.ne.s32.totalorder %s283, %s284
      %p295 = scmp.eq.s32.totalorder %s29, 0
      %p296 = por %p294, %p295
      %p297 = scmp.ne.s32.totalorder %s283, %s284
      %p298 = scmp.eq.s32.totalorder %s30, 1
      %p299 = por %p297, %p298
      %p301 = scmp.ne.s32.totalorder %s284, %s300
      %p302 = scmp.eq.s32.totalorder %s30, 0
      %p303 = por %p301, %p302
      %p304 = scmp.le.s32.totalorder 1, %s24
      %p305 = scmp.lt.s32.totalorder %s24, 3
      %p306 = pnand %p304, %p305
      %p307 = pneg %p306
      // Predicated region
      $region9: #{anchor_net_forward.1} parent=5 // pred_check
        _
      $region10: #{anchor_net_forward.1} parent=5 // pred_check_branch
        %309 = sbr.rel (%p306) target = $region12
      $region11: #{anchor_net_forward.1} parent=5 // pred_region
        %s310 = ssub.s32 %s24, 1
        // Predicated region
        $region13: #{anchor_net_forward.1} parent=11 // pred_check
          %p311 = pneg %p71
        $region14: #{anchor_net_forward.1} parent=11 // pred_check_branch
          %313 = sbr.rel (%p311) target = $region16
        $region15: #{anchor_net_forward.1} parent=11 // pred_region
          _
        $region16: #{anchor_net_forward.1} parent=11 // pred_fallthru
          _
        // Predicated region
        $region17: #{anchor_net_forward.1} parent=11 // pred_check
          %p314 = pneg %p92
        $region18: #{anchor_net_forward.1} parent=11 // pred_check_branch
          %316 = sbr.rel (%p314) target = $region20
        $region19: #{anchor_net_forward.1} parent=11 // pred_region
          _
        $region20: #{anchor_net_forward.1} parent=11 // pred_fallthru
          _
        // Predicated region
        $region21: #{anchor_net_forward.1} parent=11 // pred_check
          %p317 = pneg %p113
        $region22: #{anchor_net_forward.1} parent=11 // pred_check_branch
          %319 = sbr.rel (%p317) target = $region24
        $region23: #{anchor_net_forward.1} parent=11 // pred_region
          _
        $region24: #{anchor_net_forward.1} parent=11 // pred_fallthru
          _
        // Predicated region
        $region25: #{anchor_net_forward.1} parent=11 // pred_check
          %p320 = pneg %p134
        $region26: #{anchor_net_forward.1} parent=11 // pred_check_branch
          %322 = sbr.rel (%p320) target = $region28
        $region27: #{anchor_net_forward.1} parent=11 // pred_region
          _
        $region28: #{anchor_net_forward.1} parent=11 // pred_fallthru
          _
        // Predicated region
        $region29: #{anchor_net_forward.1} parent=11 // pred_check
          %p323 = pneg %p155
        $region30: #{anchor_net_forward.1} parent=11 // pred_check_branch
          %325 = sbr.rel (%p323) target = $region32
        $region31: #{anchor_net_forward.1} parent=11 // pred_region
          _
        $region32: #{anchor_net_forward.1} parent=11 // pred_fallthru
          _
        // Predicated region
        $region33: #{anchor_net_forward.1} parent=11 // pred_check
          %p326 = pneg %p176
        $region34: #{anchor_net_forward.1} parent=11 // pred_check_branch
          %328 = sbr.rel (%p326) target = $region36
        $region35: #{anchor_net_forward.1} parent=11 // pred_region
          _
        $region36: #{anchor_net_forward.1} parent=11 // pred_fallthru
          _
        // Predicated region
        $region37: #{anchor_net_forward.1} parent=11 // pred_check
          %p329 = pneg %p197
        $region38: #{anchor_net_forward.1} parent=11 // pred_check_branch
          %331 = sbr.rel (%p329) target = $region40
        $region39: #{anchor_net_forward.1} parent=11 // pred_region
          _
        $region40: #{anchor_net_forward.1} parent=11 // pred_fallthru
          _
        // Predicated region
        $region41: #{anchor_net_forward.1} parent=11 // pred_check
          %p332 = pneg %p218
        $region42: #{anchor_net_forward.1} parent=11 // pred_check_branch
          %334 = sbr.rel (%p332) target = $region44
        $region43: #{anchor_net_forward.1} parent=11 // pred_region
          _
        $region44: #{anchor_net_forward.1} parent=11 // pred_fallthru
          _
      $region12: #{anchor_net_forward.1} parent=5 // pred_fallthru
        _
      %p335 = scmp.lt.s32.totalorder %s24, 2
      // Predicated region
      $region45: #{anchor_net_forward.1} parent=5 // pred_check
        %p336 = pneg %p335
      $region46: #{anchor_net_forward.1} parent=5 // pred_check_branch
        %338 = sbr.rel (%p336) target = $region48
      $region47: #{anchor_net_forward.1} parent=5 // pred_region
        // Predicated region
        $region49: #{anchor_net_forward.1} parent=47 // pred_check
          %p339 = pneg %p44
        $region50: #{anchor_net_forward.1} parent=47 // pred_check_branch
          %341 = sbr.rel (%p339) target = $region52
        $region51: #{anchor_net_forward.1} parent=47 // pred_region
          %p342 = scmp.lt.s32.totalorder %s24, 1
          %s343 = scalar_select %p342, %s24, 1
          %s344 = smul.addr %s343, 8
          %s345 = smul.addr %s344, 4
          %s346 = scalar_lea.vmem %s0, %s345
        $region52: #{anchor_net_forward.1} parent=47 // pred_fallthru
          _
      $region48: #{anchor_net_forward.1} parent=5 // pred_fallthru
        _
      %p347 = scmp.le.s32.totalorder 1, %s24
      %p348 = scmp.lt.s32.totalorder %s24, 3
      %p349 = pnand %p347, %p348
      %p350 = pneg %p349
      // Predicated region
      $region53: #{anchor_net_forward.1} parent=5 // pred_check
        _
      $region54: #{anchor_net_forward.1} parent=5 // pred_check_branch
        %352 = sbr.rel (%p349) target = $region56
      $region55: #{anchor_net_forward.1} parent=5 // pred_region
        %s353 = ssub.s32 %s24, 1
        %p354 = scmp.lt.s32.totalorder %s29, 1
        %s355 = scalar_select %p354, %s29, 1
        %s356 = smul.addr %s355, 8
        %s357 = smul.addr %s356, 4
        %s358 = scalar_lea.vmem %s0, %s357
        %p359 = pneg %p50
        %p360 = pneg %p47
        %p361 = pneg %p71
        %p362 = pneg %p68
        %p363 = pneg %p92
        %p364 = pneg %p89
        %p365 = pneg %p113
        %p366 = pneg %p110
        %p367 = pneg %p134
        %p368 = pneg %p131
        %p369 = pneg %p155
        %p370 = pneg %p152
        %p371 = pneg %p176
        %p372 = pneg %p173
        %p373 = pneg %p197
        %p374 = pneg %p194
        %p375 = pneg %p218
        %p376 = pneg %p215
        %p377 = pneg %p244
        %p378 = pneg %p241
        %s379 = sand.u32 %s231, 1
        %s380 = scalar_lea.sflag [#allocation4], %s379
        %s381 = sand.u32 %s231, 1
        %s382 = scalar_lea.vmem [#allocation3], %s381
        %p383 = pneg %p270
        %p384 = pneg %p267
        %s385 = sand.u32 %s29, 1
        %s386 = scalar_lea.sflag [#allocation6], %s385
        %s387 = sand.u32 %s257, 1
        %s388 = scalar_lea.vmem [#allocation5], %s387
        %p389 = pneg %p296
        %p390 = pneg %p293
        %s391 = sand.u32 %s29, 1
        %s392 = scalar_lea.sflag [#allocation6], %s391
        %s393 = sand.u32 %s283, 1
        %s394 = scalar_lea.vmem [#allocation7], %s393
        %p395 = scmp.lt.s32.totalorder %s29, 1
        %s396 = scalar_select %p395, %s29, 1
        %s397 = smul.addr %s396, 8
        %s398 = smul.addr %s397, 4
        %s399 = scalar_lea.vmem %s0, %s398
        %v403 = vlaneseq
        %v404 = vand.u32 %v403, 127
        %v405 = vadd.s32 %v404, 128
        %vm406 = vcmp.lt.s32.totalorder %v404, 0
        %v407 = vsub.s32 0, %v404
        %v408 = vsel %vm406, %v407, %v404
        %v409 = vshrl.u32 %v408, 4
        %v410 = vand.u32 %v408, 15
        %v411 = vsub.s32 0, %v410
        %v412 = vsel %vm406, %v411, %v410
        %vm413 = vcmp.lt.s32.totalorder %v405, 0
        %v414 = vsub.s32 0, %v405
        %v415 = vsel %vm413, %v414, %v405
        %v416 = vshrl.u32 %v415, 4
        %v417 = vand.u32 %v415, 15
        %v418 = vsub.s32 0, %v417
        %v419 = vsel %vm413, %v418, %v417
        %vm420 = vcmp.ne.s32.totalorder %v412, 0
        %vm421 = vcmp.ne.s32.totalorder %v419, 0
        %vm422 = vcmp.lt.s32.totalorder %v412, 0
        %vm423 = vcmp.lt.s32.totalorder %v419, 0
        %vm424 = vmand %vm422, %vm420
        %vm425 = vmand %vm423, %vm421
        %v426 = vadd.s32 %v412, 16
        %v427 = vadd.s32 %v419, 16
        %v428 = vsel %vm424, %v426, %v412
        %v429 = vsel %vm425, %v427, %v419
        %vm430 = vcmp.ge.s32.totalorder %v428, 1
        %vm431 = vcmp.ge.s32.totalorder %v429, 1
        %vm432 = vcmp.le.s32.totalorder %v428, 14
        %vm433 = vcmp.le.s32.totalorder %v429, 14
        %434 = vst [vmem:[#allocation2] sm:$0xff] 0
        %435 = vst [vmem:[#allocation2 + $0x20] sm:$0xff] 0
        %436 = vst [vmem:[#allocation2 + $0x18] sm:$0xff] 0
        %437 = vst [vmem:[#allocation2 + $0x38] sm:$0xff] 0
        %v438 = vld [vmem:[%s399] sm:$0xff]
        %v439 = vld [vmem:[%s399 + $0x8] sm:$0xff]
        %v440 = vld [vmem:[%s399 + $0x10] sm:$0xff]
        %v441 = vld [vmem:[%s399 + $0x18] sm:$0xff]
        %v446 = vunpack.c.l.b16 %v438
        %v447 = vunpack.c.h.b16 %v438
        %v448 = vunpack.c.l.b16 %v439
        %v449 = vunpack.c.h.b16 %v439
        %v450 = vunpack.c.l.b16 %v440
        %v451 = vunpack.c.h.b16 %v440
        %v452 = vunpack.c.l.b16 %v441
        %v453 = vunpack.c.h.b16 %v441
        %v454 = vpack.c.b16 %v448, %v446
        %v455 = vpack.c.b16 %v449, %v447
        %v456 = vpack.c.b16 %v452, %v450
        %v457 = vpack.c.b16 %v453, %v451
        %462 = vst [vmem:[#allocation2 + $0x8] sm:$0xff] %v454
        %463 = vst [vmem:[#allocation2 + $0x10] sm:$0xff] %v455
        %464 = vst [vmem:[#allocation2 + $0x28] sm:$0xff] %v456
        %465 = vst [vmem:[#allocation2 + $0x30] sm:$0xff] %v457
        %v466 = vld [vmem:[#allocation2] sm:$0xff]
        %v467 = vld [vmem:[#allocation2 + $0x8] sm:$0xff]
        %v468 = vld [vmem:[#allocation2 + $0x10] sm:$0xff]
        %v469 = vld [vmem:[#allocation2 + $0x20] sm:$0xff]
        %v470 = vld [vmem:[#allocation2 + $0x28] sm:$0xff]
        %v471 = vld [vmem:[#allocation2 + $0x30] sm:$0xff]
        %v472 = vsel %vm430, 1, 0
        %v473 = vsel %vm431, 1, 0
        %vm474 = vcmp.eq.s32.totalorder %v472, 1
        %vm475 = vcmp.eq.s32.totalorder %v473, 1
        %vm476 = vmpackc.low %vm475, %vm474
        %v477 = vsel %vm476, 65537, 0
        %v478 = vlaneseq
        %v479 = vshrl.u32 %v478, 7
        %v480 = vsub.s32 0, %v479
        %v481 = vrot.slane %v477, %v480
        %v482 = vlaneseq
        %v483 = vshrl.u32 %v482, 7
        %v484 = vsub.s32 4, %v483
        %v485 = vrot.slane %v477, %v484
        %486 = vrot.lane.b32.xlu0 %v481, 111
        %v487 = vpop.permute.xlu0 %486
        %488 = vrot.lane.b32.xlu0 %v485, 111
        %v489 = vpop.permute.xlu0 %488
        %vm490 = vcmask 908288
        %v491 = vsel %vm490, %v487, %v489
        %vm492 = vcmp.ne.s16.totalorder %v487, 0
        %vm493 = vcmp.ne.s16.totalorder %v491, 0
        %vm494 = vcmp.ne.s16.totalorder %v489, 0
        %v495 = vsel %vm492, %v466, 0
        %v496 = vsel %vm493, %v467, 0
        %v497 = vsel %vm494, %v468, 0
        %v498 = vsel %vm492, %v469, 0
        %v499 = vsel %vm493, %v470, 0
        %v500 = vsel %vm494, %v471, 0
        %v501 = vsel %vm432, 1, 0
        %v502 = vsel %vm433, 1, 0
        %vm503 = vcmp.eq.s32.totalorder %v501, 1
        %vm504 = vcmp.eq.s32.totalorder %v502, 1
        %vm505 = vmpackc.low %vm504, %vm503
        %v506 = vsel %vm505, 65537, 0
        %v507 = vlaneseq
        %v508 = vshrl.u32 %v507, 7
        %v509 = vsub.s32 0, %v508
        %v510 = vrot.slane %v506, %v509
        %v511 = vlaneseq
        %v512 = vshrl.u32 %v511, 7
        %v513 = vsub.s32 4, %v512
        %v514 = vrot.slane %v506, %v513
        %515 = vrot.lane.b32.xlu0 %v510, 113
        %v516 = vpop.permute.xlu0 %515
        %517 = vrot.lane.b32.xlu0 %v514, 113
        %v518 = vpop.permute.xlu0 %517
        %vm519 = vcmask 924672
        %v520 = vsel %vm519, %v516, %v518
        %vm521 = vcmp.ne.s16.totalorder %v516, 0
        %vm522 = vcmp.ne.s16.totalorder %v520, 0
        %vm523 = vcmp.ne.s16.totalorder %v518, 0
        %v524 = vsel %vm521, %v466, 0
        %v525 = vsel %vm522, %v467, 0
        %v526 = vsel %vm523, %v468, 0
        %v527 = vsel %vm521, %v469, 0
        %v528 = vsel %vm522, %v470, 0
        %v529 = vsel %vm523, %v471, 0
        %530 = vrot.lane.b32.xlu0 %v481, 127
        %v531 = vpop.permute.xlu0 %530
        %532 = vrot.lane.b32.xlu0 %v485, 127
        %v533 = vpop.permute.xlu0 %532
        %vm534 = vcmask 1039360
        %v535 = vsel %vm534, %v531, %v533
        %vm536 = vcmp.ne.s16.totalorder %v531, 0
        %vm537 = vcmp.ne.s16.totalorder %v535, 0
        %vm538 = vcmp.ne.s16.totalorder %v533, 0
        %v539 = vsel %vm536, %v466, 0
        %v540 = vsel %vm537, %v467, 0
        %v541 = vsel %vm538, %v468, 0
        %v542 = vsel %vm536, %v469, 0
        %v543 = vsel %vm537, %v470, 0
        %v544 = vsel %vm538, %v471, 0
        %v545 = vld [vmem:[#allocation2 + $0x8] sm:$0xff]
        %v546 = vld [vmem:[#allocation2 + $0x10] sm:$0xff]
        %v547 = vld [vmem:[#allocation2 + $0x18] sm:$0xff]
        %v548 = vld [vmem:[#allocation2 + $0x28] sm:$0xff]
        %v549 = vld [vmem:[#allocation2 + $0x30] sm:$0xff]
        %v550 = vld [vmem:[#allocation2 + $0x38] sm:$0xff]
        %551 = vrot.lane.b32.xlu0 %v510, 1
        %v552 = vpop.permute.xlu0 %551
        %553 = vrot.lane.b32.xlu0 %v514, 1
        %v554 = vpop.permute.xlu0 %553
        %vm555 = vcmask 7168
        %v556 = vsel %vm555, %v552, %v554
        %vm557 = vcmp.ne.s16.totalorder %v552, 0
        %vm558 = vcmp.ne.s16.totalorder %v556, 0
        %vm559 = vcmp.ne.s16.totalorder %v554, 0
        %v560 = vsel %vm557, %v545, 0
        %v561 = vsel %vm558, %v546, 0
        %v562 = vsel %vm559, %v547, 0
        %v563 = vsel %vm557, %v548, 0
        %v564 = vsel %vm558, %v549, 0
        %v565 = vsel %vm559, %v550, 0
        %566 = vrot.lane.b32.xlu0 %v481, 15
        %v567 = vpop.permute.xlu0 %566
        %568 = vrot.lane.b32.xlu0 %v485, 15
        %v569 = vpop.permute.xlu0 %568
        %vm570 = vcmask 121856
        %v571 = vsel %vm570, %v567, %v569
        %vm572 = vcmp.ne.s16.totalorder %v567, 0
        %vm573 = vcmp.ne.s16.totalorder %v571, 0
        %vm574 = vcmp.ne.s16.totalorder %v569, 0
        %v575 = vsel %vm572, %v545, 0
        %v576 = vsel %vm573, %v546, 0
        %v577 = vsel %vm574, %v547, 0
        %v578 = vsel %vm572, %v548, 0
        %v579 = vsel %vm573, %v549, 0
        %v580 = vsel %vm574, %v550, 0
        %581 = vrot.lane.b32.xlu0 %v510, 17
        %v582 = vpop.permute.xlu0 %581
        %583 = vrot.lane.b32.xlu0 %v514, 17
        %v584 = vpop.permute.xlu0 %583
        %vm585 = vcmask 138240
        %v586 = vsel %vm585, %v582, %v584
        %vm587 = vcmp.ne.s16.totalorder %v582, 0
        %vm588 = vcmp.ne.s16.totalorder %v586, 0
        %vm589 = vcmp.ne.s16.totalorder %v584, 0
        %v590 = vsel %vm587, %v545, 0
        %v591 = vsel %vm588, %v546, 0
        %v592 = vsel %vm589, %v547, 0
        %v593 = vsel %vm587, %v548, 0
        %v594 = vsel %vm588, %v549, 0
        %v595 = vsel %vm589, %v550, 0
        %602 = vrot.lane.b32.xlu0 %v466, 127
        %v603 = vpop.permute.xlu0 %602
        %604 = vrot.lane.b32.xlu0 %v467, 127
        %v605 = vpop.permute.xlu0 %604
        %606 = vrot.lane.b32.xlu0 %v468, 127
        %v607 = vpop.permute.xlu0 %606
        %608 = vrot.lane.b32.xlu0 %v469, 127
        %v609 = vpop.permute.xlu0 %608
        %610 = vrot.lane.b32.xlu0 %v470, 127
        %v611 = vpop.permute.xlu0 %610
        %612 = vrot.lane.b32.xlu0 %v471, 127
        %v613 = vpop.permute.xlu0 %612
        %v614 = vsel %vm534, %v603, %v605
        %v615 = vsel %vm534, %v605, %v607
        %v616 = vsel %vm534, %v609, %v611
        %v617 = vsel %vm534, %v611, %v613
        %624 = vrot.lane.b32.xlu0 %v524, 126
        %v625 = vpop.permute.xlu0 %624
        %626 = vrot.lane.b32.xlu0 %v525, 126
        %v627 = vpop.permute.xlu0 %626
        %628 = vrot.lane.b32.xlu0 %v526, 126
        %v629 = vpop.permute.xlu0 %628
        %630 = vrot.lane.b32.xlu0 %v527, 126
        %v631 = vpop.permute.xlu0 %630
        %632 = vrot.lane.b32.xlu0 %v528, 126
        %v633 = vpop.permute.xlu0 %632
        %634 = vrot.lane.b32.xlu0 %v529, 126
        %v635 = vpop.permute.xlu0 %634
        %vm636 = vcmask 1031168
        %v637 = vsel %vm636, %v625, %v627
        %v638 = vsel %vm636, %v627, %v629
        %v639 = vsel %vm636, %v631, %v633
        %v640 = vsel %vm636, %v633, %v635
        %647 = vrot.lane.b32.xlu0 %v539, 112
        %v648 = vpop.permute.xlu0 %647
        %649 = vrot.lane.b32.xlu0 %v540, 112
        %v650 = vpop.permute.xlu0 %649
        %651 = vrot.lane.b32.xlu0 %v541, 112
        %v652 = vpop.permute.xlu0 %651
        %653 = vrot.lane.b32.xlu0 %v542, 112
        %v654 = vpop.permute.xlu0 %653
        %655 = vrot.lane.b32.xlu0 %v543, 112
        %v656 = vpop.permute.xlu0 %655
        %657 = vrot.lane.b32.xlu0 %v544, 112
        %v658 = vpop.permute.xlu0 %657
        %vm659 = vcmask 916480
        %v660 = vsel %vm659, %v648, %v650
        %v661 = vsel %vm659, %v650, %v652
        %v662 = vsel %vm659, %v654, %v656
        %v663 = vsel %vm659, %v656, %v658
        %664 = vrot.lane.b32.xlu0 %v467, 111
        %v665 = vpop.permute.xlu0 %664
        %666 = vrot.lane.b32.xlu0 %v468, 111
        %v667 = vpop.permute.xlu0 %666
        %668 = vrot.lane.b32.xlu0 %v470, 111
        %v669 = vpop.permute.xlu0 %668
        %670 = vrot.lane.b32.xlu0 %v471, 111
        %v671 = vpop.permute.xlu0 %670
        %v672 = vsel %vm490, %v665, %v667
        %v673 = vsel %vm490, %v669, %v671
        %680 = vrot.lane.b32.xlu0 %v560, 110
        %v681 = vpop.permute.xlu0 %680
        %682 = vrot.lane.b32.xlu0 %v561, 110
        %v683 = vpop.permute.xlu0 %682
        %684 = vrot.lane.b32.xlu0 %v562, 110
        %v685 = vpop.permute.xlu0 %684
        %686 = vrot.lane.b32.xlu0 %v563, 110
        %v687 = vpop.permute.xlu0 %686
        %688 = vrot.lane.b32.xlu0 %v564, 110
        %v689 = vpop.permute.xlu0 %688
        %690 = vrot.lane.b32.xlu0 %v565, 110
        %v691 = vpop.permute.xlu0 %690
        %vm692 = vcmask 900096
        %v693 = vsel %vm692, %v681, %v683
        %v694 = vsel %vm692, %v683, %v685
        %v695 = vsel %vm692, %v687, %v689
        %v696 = vsel %vm692, %v689, %v691
        %703 = vrot.lane.b32.xlu0 %v575, 96
        %v704 = vpop.permute.xlu0 %703
        %705 = vrot.lane.b32.xlu0 %v576, 96
        %v706 = vpop.permute.xlu0 %705
        %707 = vrot.lane.b32.xlu0 %v577, 96
        %v708 = vpop.permute.xlu0 %707
        %709 = vrot.lane.b32.xlu0 %v578, 96
        %v710 = vpop.permute.xlu0 %709
        %711 = vrot.lane.b32.xlu0 %v579, 96
        %v712 = vpop.permute.xlu0 %711
        %713 = vrot.lane.b32.xlu0 %v580, 96
        %v714 = vpop.permute.xlu0 %713
        %vm715 = vcmask 785408
        %v716 = vsel %vm715, %v704, %v706
        %v717 = vsel %vm715, %v706, %v708
        %v718 = vsel %vm715, %v710, %v712
        %v719 = vsel %vm715, %v712, %v714
        %726 = vrot.lane.b32.xlu0 %v545, 95
        %v727 = vpop.permute.xlu0 %726
        %728 = vrot.lane.b32.xlu0 %v546, 95
        %v729 = vpop.permute.xlu0 %728
        %730 = vrot.lane.b32.xlu0 %v547, 95
        %v731 = vpop.permute.xlu0 %730
        %732 = vrot.lane.b32.xlu0 %v548, 95
        %v733 = vpop.permute.xlu0 %732
        %734 = vrot.lane.b32.xlu0 %v549, 95
        %v735 = vpop.permute.xlu0 %734
        %736 = vrot.lane.b32.xlu0 %v550, 95
        %v737 = vpop.permute.xlu0 %736
        %vm738 = vcmask 777216
        %v739 = vsel %vm738, %v727, %v729
        %v740 = vsel %vm738, %v729, %v731
        %v741 = vsel %vm738, %v733, %v735
        %v742 = vsel %vm738, %v735, %v737
        %749 = vrot.lane.b32.xlu0 %v590, 94
        %v750 = vpop.permute.xlu0 %749
        %751 = vrot.lane.b32.xlu0 %v591, 94
        %v752 = vpop.permute.xlu0 %751
        %753 = vrot.lane.b32.xlu0 %v592, 94
        %v754 = vpop.permute.xlu0 %753
        %755 = vrot.lane.b32.xlu0 %v593, 94
        %v756 = vpop.permute.xlu0 %755
        %757 = vrot.lane.b32.xlu0 %v594, 94
        %v758 = vpop.permute.xlu0 %757
        %759 = vrot.lane.b32.xlu0 %v595, 94
        %v760 = vpop.permute.xlu0 %759
        %vm761 = vcmask 769024
        %v762 = vsel %vm761, %v750, %v752
        %v763 = vsel %vm761, %v752, %v754
        %v764 = vsel %vm761, %v756, %v758
        %v765 = vsel %vm761, %v758, %v760
        %v766 = vld [vmem:[%s1] sm:$0xff]
        %v767 = vld [vmem:[%s1 + $0x8] sm:$0xf]
        %v768 = vld [vmem:[%s1 + $0xc] sm:$0xff]
        %v769 = vld [vmem:[%s1 + $0x14] sm:$0xf]
        %v770 = vld [vmem:[%s1 + $0x18] sm:$0xff]
        %v771 = vld [vmem:[%s1 + $0x20] sm:$0xf]
        %v772 = vld [vmem:[%s1 + $0x24] sm:$0xff]
        %v773 = vld [vmem:[%s1 + $0x2c] sm:$0xf]
        %v774 = vld [vmem:[%s2] sm:$0xff]
        %v775 = vld [vmem:[%s2 + $0x8] sm:$0xff]
        %v776 = vld [vmem:[%s2 + $0x10] sm:$0xff]
        %v777 = vld [vmem:[%s2 + $0x18] sm:$0xff]
        %779 = vset.pattern.permute.xlu0 0
        %780 = vperm.xlu0 %779, %v774
        %v781 = vpop.permute.xlu0 %780
        %784 = vset.pattern.permute.xlu0 0
        %785 = vperm.xlu0 %784, %v775
        %v786 = vpop.permute.xlu0 %785
        %789 = vset.pattern.permute.xlu0 0
        %790 = vperm.xlu0 %789, %v776
        %v791 = vpop.permute.xlu0 %790
        %794 = vset.pattern.permute.xlu0 0
        %795 = vperm.xlu0 %794, %v777
        %v796 = vpop.permute.xlu0 %795
        %v806 = vunpack.c.l.b16 %v766
        %v807 = vunpack.c.h.b16 %v766
        %v808 = vunpack.c.l.b16 %v767
        %v809 = vunpack.c.l.b16 %v768
        %v810 = vunpack.c.h.b16 %v768
        %v811 = vunpack.c.l.b16 %v769
        %v812 = vunpack.c.l.b16 %v770
        %v813 = vunpack.c.h.b16 %v770
        %v814 = vunpack.c.l.b16 %v771
        %v815 = vunpack.c.l.b16 %v772
        %v816 = vunpack.c.h.b16 %v772
        %v817 = vunpack.c.l.b16 %v773
        %v818 = vpack.c.b16 %v809, %v806
        %v819 = vpack.c.b16 %v810, %v807
        %v820 = vpack.c.b16 %v811, %v808
        %v821 = vpack.c.b16 %v815, %v812
        %v822 = vpack.c.b16 %v816, %v813
        %v823 = vpack.c.b16 %v817, %v814
        %834 = vrot.lane.b32.xlu0 %v495, 17
        %v835 = vpop.permute.xlu0 %834
        %836 = vrot.lane.b32.xlu0 %v496, 17
        %v837 = vpop.permute.xlu0 %836
        %838 = vrot.lane.b32.xlu0 %v497, 17
        %v839 = vpop.permute.xlu0 %838
        %840 = vrot.lane.b32.xlu0 %v498, 17
        %v841 = vpop.permute.xlu0 %840
        %842 = vrot.lane.b32.xlu0 %v499, 17
        %v843 = vpop.permute.xlu0 %842
        %844 = vrot.lane.b32.xlu0 %v500, 17
        %v845 = vpop.permute.xlu0 %844
        %846 = vrot.lane.b32.xlu0 %v614, 17
        %v847 = vpop.permute.xlu0 %846
        %848 = vrot.lane.b32.xlu0 %v615, 17
        %v849 = vpop.permute.xlu0 %848
        %850 = vrot.lane.b32.xlu0 %v607, 17
        %v851 = vpop.permute.xlu0 %850
        %852 = vrot.lane.b32.xlu0 %v616, 17
        %v853 = vpop.permute.xlu0 %852
        %854 = vrot.lane.b32.xlu0 %v617, 17
        %v855 = vpop.permute.xlu0 %854
        %856 = vrot.lane.b32.xlu0 %v613, 17
        %v857 = vpop.permute.xlu0 %856
        %858 = vrot.lane.b32.xlu0 %v637, 17
        %v859 = vpop.permute.xlu0 %858
        %860 = vrot.lane.b32.xlu0 %v638, 17
        %v861 = vpop.permute.xlu0 %860
        %862 = vrot.lane.b32.xlu0 %v629, 17
        %v863 = vpop.permute.xlu0 %862
        %864 = vrot.lane.b32.xlu0 %v639, 17
        %v865 = vpop.permute.xlu0 %864
        %866 = vrot.lane.b32.xlu0 %v640, 17
        %v867 = vpop.permute.xlu0 %866
        %868 = vrot.lane.b32.xlu0 %v635, 17
        %v869 = vpop.permute.xlu0 %868
        %870 = vrot.lane.b32.xlu0 %v660, 17
        %v871 = vpop.permute.xlu0 %870
        %872 = vrot.lane.b32.xlu0 %v661, 17
        %v873 = vpop.permute.xlu0 %872
        %874 = vrot.lane.b32.xlu0 %v652, 17
        %v875 = vpop.permute.xlu0 %874
        %876 = vrot.lane.b32.xlu0 %v662, 17
        %v877 = vpop.permute.xlu0 %876
        %878 = vrot.lane.b32.xlu0 %v663, 17
        %v879 = vpop.permute.xlu0 %878
        %880 = vrot.lane.b32.xlu0 %v658, 17
        %v881 = vpop.permute.xlu0 %880
        %882 = vrot.lane.b32.xlu0 %v665, 17
        %v883 = vpop.permute.xlu0 %882
        %884 = vrot.lane.b32.xlu0 %v672, 17
        %v885 = vpop.permute.xlu0 %884
        %886 = vrot.lane.b32.xlu0 %v667, 17
        %v887 = vpop.permute.xlu0 %886
        %888 = vrot.lane.b32.xlu0 %v669, 17
        %v889 = vpop.permute.xlu0 %888
        %890 = vrot.lane.b32.xlu0 %v673, 17
        %v891 = vpop.permute.xlu0 %890
        %892 = vrot.lane.b32.xlu0 %v671, 17
        %v893 = vpop.permute.xlu0 %892
        %894 = vrot.lane.b32.xlu0 %v681, 17
        %v895 = vpop.permute.xlu0 %894
        %896 = vrot.lane.b32.xlu0 %v693, 17
        %v897 = vpop.permute.xlu0 %896
        %898 = vrot.lane.b32.xlu0 %v694, 17
        %v899 = vpop.permute.xlu0 %898
        %900 = vrot.lane.b32.xlu0 %v687, 17
        %v901 = vpop.permute.xlu0 %900
        %902 = vrot.lane.b32.xlu0 %v695, 17
        %v903 = vpop.permute.xlu0 %902
        %904 = vrot.lane.b32.xlu0 %v696, 17
        %v905 = vpop.permute.xlu0 %904
        %906 = vrot.lane.b32.xlu0 %v704, 17
        %v907 = vpop.permute.xlu0 %906
        %908 = vrot.lane.b32.xlu0 %v716, 17
        %v909 = vpop.permute.xlu0 %908
        %910 = vrot.lane.b32.xlu0 %v717, 17
        %v911 = vpop.permute.xlu0 %910
        %912 = vrot.lane.b32.xlu0 %v710, 17
        %v913 = vpop.permute.xlu0 %912
        %914 = vrot.lane.b32.xlu0 %v718, 17
        %v915 = vpop.permute.xlu0 %914
        %916 = vrot.lane.b32.xlu0 %v719, 17
        %v917 = vpop.permute.xlu0 %916
        %918 = vrot.lane.b32.xlu0 %v727, 17
        %v919 = vpop.permute.xlu0 %918
        %920 = vrot.lane.b32.xlu0 %v739, 17
        %v921 = vpop.permute.xlu0 %920
        %922 = vrot.lane.b32.xlu0 %v740, 17
        %v923 = vpop.permute.xlu0 %922
        %924 = vrot.lane.b32.xlu0 %v733, 17
        %v925 = vpop.permute.xlu0 %924
        %926 = vrot.lane.b32.xlu0 %v741, 17
        %v927 = vpop.permute.xlu0 %926
        %928 = vrot.lane.b32.xlu0 %v742, 17
        %v929 = vpop.permute.xlu0 %928
        %930 = vrot.lane.b32.xlu0 %v750, 17
        %v931 = vpop.permute.xlu0 %930
        %932 = vrot.lane.b32.xlu0 %v762, 17
        %v933 = vpop.permute.xlu0 %932
        %934 = vrot.lane.b32.xlu0 %v763, 17
        %v935 = vpop.permute.xlu0 %934
        %936 = vrot.lane.b32.xlu0 %v756, 17
        %v937 = vpop.permute.xlu0 %936
        %938 = vrot.lane.b32.xlu0 %v764, 17
        %v939 = vpop.permute.xlu0 %938
        %940 = vrot.lane.b32.xlu0 %v765, 17
        %v941 = vpop.permute.xlu0 %940
        %v942 = vsel %vm585, %v835, %v837
        %v943 = vsel %vm585, %v837, %v839
        %v944 = vsel %vm585, %v841, %v843
        %v945 = vsel %vm585, %v843, %v845
        %v946 = vsel %vm585, %v847, %v849
        %v947 = vsel %vm585, %v849, %v851
        %v948 = vsel %vm585, %v853, %v855
        %v949 = vsel %vm585, %v855, %v857
        %v950 = vsel %vm585, %v859, %v861
        %v951 = vsel %vm585, %v861, %v863
        %v952 = vsel %vm585, %v865, %v867
        %v953 = vsel %vm585, %v867, %v869
        %v954 = vsel %vm585, %v871, %v873
        %v955 = vsel %vm585, %v873, %v875
        %v956 = vsel %vm585, %v877, %v879
        %v957 = vsel %vm585, %v879, %v881
        %v958 = vsel %vm585, %v883, %v885
        %v959 = vsel %vm585, %v885, %v887
        %v960 = vsel %vm585, %v889, %v891
        %v961 = vsel %vm585, %v891, %v893
        %v962 = vsel %vm585, %v895, %v897
        %v963 = vsel %vm585, %v897, %v899
        %v964 = vsel %vm585, %v901, %v903
        %v965 = vsel %vm585, %v903, %v905
        %v966 = vsel %vm585, %v907, %v909
        %v967 = vsel %vm585, %v909, %v911
        %v968 = vsel %vm585, %v913, %v915
        %v969 = vsel %vm585, %v915, %v917
        %v970 = vsel %vm585, %v919, %v921
        %v971 = vsel %vm585, %v921, %v923
        %v972 = vsel %vm585, %v925, %v927
        %v973 = vsel %vm585, %v927, %v929
        %v974 = vsel %vm585, %v931, %v933
        %v975 = vsel %vm585, %v933, %v935
        %v976 = vsel %vm585, %v937, %v939
        %v977 = vsel %vm585, %v939, %v941
        %vm1014 = vcmask 261120
        %v1016 = vsel %vm1014, %v820, 0
        %v1019 = vsel %vm1014, %v823, 0
        %1021 = vmatprep.subr.bf16.mxu0 %v943
        %1022 = vmatpush1.bf16.msra.mxu0 %v942
        %1023 = vmatprep.subr.bf16.mxu0 %v945
        %1024 = vmatpush1.bf16.msra.mxu0 %v944
        %1025 = vmatprep.subr.bf16.mxu0 %v947
        %1026 = vmatpush1.bf16.msra.mxu0 %v946
        %1027 = vmatprep.subr.bf16.mxu0 %v949
        %1028 = vmatpush1.bf16.msra.mxu0 %v948
        %1029 = vmatprep.subr.bf16.mxu0 %v951
        %1030 = vmatpush1.bf16.msra.mxu0 %v950
        %1031 = vmatprep.subr.bf16.mxu0 %v953
        %1032 = vmatpush1.bf16.msra.mxu0 %v952
        %1033 = vmatprep.subr.bf16.mxu0 %v955
        %1034 = vmatpush1.bf16.msra.mxu0 %v954
        %1035 = vmatprep.subr.bf16.mxu0 %v957
        %1036 = vmatpush1.bf16.msra.mxu0 %v956
        %1037 = vmatprep.subr.bf16.mxu0 %v959
        %1038 = vmatpush1.bf16.msra.mxu0 %v958
        %1039 = vmatprep.subr.bf16.mxu0 %v961
        %1040 = vmatpush1.bf16.msra.mxu0 %v960
        %1041 = vmatprep.subr.bf16.mxu0 %v963
        %1042 = vmatpush1.bf16.msra.mxu0 %v962
        %1043 = vmatprep.subr.bf16.mxu0 %v965
        %1044 = vmatpush1.bf16.msra.mxu0 %v964
        %1045 = vmatprep.subr.bf16.mxu0 %v967
        %1046 = vmatpush1.bf16.msra.mxu0 %v966
        %1047 = vmatprep.subr.bf16.mxu0 %v969
        %1048 = vmatpush1.bf16.msra.mxu0 %v968
        %1049 = vmatprep.subr.bf16.mxu0 %v971
        %1050 = vmatpush1.bf16.msra.mxu0 %v970
        %1051 = vmatprep.subr.bf16.mxu0 %v973
        %1052 = vmatpush1.bf16.msra.mxu0 %v972
        %1053 = vmatprep.mubr.bf16.mxu0 %v819
        %1054 = vmatmul.mubr.bf16.gmra.mrb[0].mxu0 %v818
        %v1055 = vpop.f32.mrb[0].mxu0
        %v1056 = vadd.f32 %v781, %v1055
        %v1057 = vpop.f32.mrb[0].mxu0
        %v1058 = vadd.f32 %v781, %v1057
        %v1059 = vpop.f32.mrb[0].mxu0
        %v1060 = vadd.f32 %v786, %v1059
        %v1061 = vpop.f32.mrb[0].mxu0
        %v1062 = vadd.f32 %v786, %v1061
        %1063 = vmatprep.mubr.bf16.mxu0 %v822
        %1064 = vmatmul.mubr.bf16.gmra.mrb[0].mxu0 %v821
        %v1065 = vpop.f32.mrb[0].mxu0
        %v1066 = vadd.f32 %v791, %v1065
        %v1067 = vpop.f32.mrb[0].mxu0
        %v1068 = vadd.f32 %v791, %v1067
        %v1069 = vpop.f32.mrb[0].mxu0
        %v1070 = vadd.f32 %v796, %v1069
        %v1071 = vpop.f32.mrb[0].mxu0
        %v1072 = vadd.f32 %v796, %v1071
        %1073 = vdwg.mxu0
        %1074 = vmatprep.subr.bf16.mxu0 %v975
        %1075 = vmatpush1.bf16.msra.mxu0 %v974
        %1076 = vmatprep.subr.bf16.mxu0 %v977
        %1077 = vmatpush1.bf16.msra.mxu0 %v976
        %1078 = vmatprep.subr.bf16.mxu0 0
        %1079 = vmatpush1.bf16.msra.mxu0 0
        %1080 = vmatprep.subr.bf16.mxu0 0
        %1081 = vmatpush1.bf16.msra.mxu0 0
        %1082 = vmatprep.subr.bf16.mxu0 0
        %1083 = vmatpush1.bf16.msra.mxu0 0
        %1084 = vmatprep.subr.bf16.mxu0 0
        %1085 = vmatpush1.bf16.msra.mxu0 0
        %1086 = vmatprep.subr.bf16.mxu0 0
        %1087 = vmatpush1.bf16.msra.mxu0 0
        %1088 = vmatprep.subr.bf16.mxu0 0
        %1089 = vmatpush1.bf16.msra.mxu0 0
        %1090 = vmatprep.subr.bf16.mxu0 0
        %1091 = vmatpush1.bf16.msra.mxu0 0
        %1092 = vmatprep.subr.bf16.mxu0 0
        %1093 = vmatpush1.bf16.msra.mxu0 0
        %1094 = vmatprep.subr.bf16.mxu0 0
        %1095 = vmatpush1.bf16.msra.mxu0 0
        %1096 = vmatprep.subr.bf16.mxu0 0
        %1097 = vmatpush1.bf16.msra.mxu0 0
        %1098 = vmatprep.subr.bf16.mxu0 0
        %1099 = vmatpush1.bf16.msra.mxu0 0
        %1100 = vmatprep.subr.bf16.mxu0 0
        %1101 = vmatpush1.bf16.msra.mxu0 0
        %1102 = vmatprep.subr.bf16.mxu0 0
        %1103 = vmatpush1.bf16.msra.mxu0 0
        %1104 = vmatprep.subr.bf16.mxu0 0
        %1105 = vmatpush1.bf16.msra.mxu0 0
        %1106 = vmatprep.mubr.bf16.mxu0 0
        %1107 = vmatmul.mubr.bf16.gmra.mrb[0].mxu0 %v1016
        %v1108 = vpop.f32.mrb[0].mxu0
        %v1109 = vadd.f32 %v1056, %v1108
        %v1110 = vpop.f32.mrb[0].mxu0
        %v1111 = vadd.f32 %v1058, %v1110
        %v1112 = vpop.f32.mrb[0].mxu0
        %v1113 = vadd.f32 %v1060, %v1112
        %v1114 = vpop.f32.mrb[0].mxu0
        %v1115 = vadd.f32 %v1062, %v1114
        %1116 = vmatprep.mubr.bf16.mxu0 0
        %1117 = vmatmul.mubr.bf16.gmra.mrb[0].mxu0 %v1019
        %v1118 = vpop.f32.mrb[0].mxu0
        %v1119 = vadd.f32 %v1066, %v1118
        %v1120 = vpop.f32.mrb[0].mxu0
        %v1121 = vadd.f32 %v1068, %v1120
        %v1122 = vpop.f32.mrb[0].mxu0
        %v1123 = vadd.f32 %v1070, %v1122
        %v1124 = vpop.f32.mrb[0].mxu0
        %v1125 = vadd.f32 %v1072, %v1124
        %1126 = vdwg.mxu0
        %v1127 = vmax.f32 %v1109, 0.0
        %v1128 = vmax.f32 %v1111, 0.0
        %v1129 = vmax.f32 %v1113, 0.0
        %v1130 = vmax.f32 %v1115, 0.0
        %v1131 = vmax.f32 %v1119, 0.0
        %v1132 = vmax.f32 %v1121, 0.0
        %v1133 = vmax.f32 %v1123, 0.0
        %v1134 = vmax.f32 %v1125, 0.0
        %v1135 = vpack.c.bf16 %v1129, %v1127
        %v1136 = vpack.c.bf16 %v1130, %v1128
        %v1137 = vpack.c.bf16 %v1133, %v1131
        %v1138 = vpack.c.bf16 %v1134, %v1132
        %1139 = vst [vmem:[#allocation2 + $0x8] sm:$0xff] %v1135
        %1140 = vst [vmem:[#allocation2 + $0x10] sm:$0xff] %v1136
        %1141 = vst [vmem:[#allocation2 + $0x28] sm:$0xff] %v1137
        %1142 = vst [vmem:[#allocation2 + $0x30] sm:$0xff] %v1138
        %v1143 = vld [vmem:[#allocation2] sm:$0xff]
        %v1144 = vld [vmem:[#allocation2 + $0x8] sm:$0xff]
        %v1145 = vld [vmem:[#allocation2 + $0x10] sm:$0xff]
        %v1146 = vld [vmem:[#allocation2 + $0x20] sm:$0xff]
        %v1147 = vld [vmem:[#allocation2 + $0x28] sm:$0xff]
        %v1148 = vld [vmem:[#allocation2 + $0x30] sm:$0xff]
        %v1149 = vsel %vm492, %v1143, 0
        %v1150 = vsel %vm493, %v1144, 0
        %v1151 = vsel %vm494, %v1145, 0
        %v1152 = vsel %vm492, %v1146, 0
        %v1153 = vsel %vm493, %v1147, 0
        %v1154 = vsel %vm494, %v1148, 0
        %v1155 = vsel %vm521, %v1143, 0
        %v1156 = vsel %vm522, %v1144, 0
        %v1157 = vsel %vm523, %v1145, 0
        %v1158 = vsel %vm521, %v1146, 0
        %v1159 = vsel %vm522, %v1147, 0
        %v1160 = vsel %vm523, %v1148, 0
        %v1161 = vsel %vm536, %v1143, 0
        %v1162 = vsel %vm537, %v1144, 0
        %v1163 = vsel %vm538, %v1145, 0
        %v1164 = vsel %vm536, %v1146, 0
        %v1165 = vsel %vm537, %v1147, 0
        %v1166 = vsel %vm538, %v1148, 0
        %v1167 = vld [vmem:[#allocation2 + $0x8] sm:$0xff]
        %v1168 = vld [vmem:[#allocation2 + $0x10] sm:$0xff]
        %v1169 = vld [vmem:[#allocation2 + $0x18] sm:$0xff]
        %v1170 = vld [vmem:[#allocation2 + $0x28] sm:$0xff]
        %v1171 = vld [vmem:[#allocation2 + $0x30] sm:$0xff]
        %v1172 = vld [vmem:[#allocation2 + $0x38] sm:$0xff]
        %v1173 = vsel %vm557, %v1167, 0
        %v1174 = vsel %vm558, %v1168, 0
        %v1175 = vsel %vm559, %v1169, 0
        %v1176 = vsel %vm557, %v1170, 0
        %v1177 = vsel %vm558, %v1171, 0
        %v1178 = vsel %vm559, %v1172, 0
        %v1179 = vsel %vm572, %v1167, 0
        %v1180 = vsel %vm573, %v1168, 0
        %v1181 = vsel %vm574, %v1169, 0
        %v1182 = vsel %vm572, %v1170, 0
        %v1183 = vsel %vm573, %v1171, 0
        %v1184 = vsel %vm574, %v1172, 0
        %v1185 = vsel %vm587, %v1167, 0
        %v1186 = vsel %vm588, %v1168, 0
        %v1187 = vsel %vm589, %v1169, 0
        %v1188 = vsel %vm587, %v1170, 0
        %v1189 = vsel %vm588, %v1171, 0
        %v1190 = vsel %vm589, %v1172, 0
        %1197 = vrot.lane.b32.xlu0 %v1143, 127
        %v1198 = vpop.permute.xlu0 %1197
        %1199 = vrot.lane.b32.xlu0 %v1144, 127
        %v1200 = vpop.permute.xlu0 %1199
        %1201 = vrot.lane.b32.xlu0 %v1145, 127
        %v1202 = vpop.permute.xlu0 %1201
        %1203 = vrot.lane.b32.xlu0 %v1146, 127
        %v1204 = vpop.permute.xlu0 %1203
        %1205 = vrot.lane.b32.xlu0 %v1147, 127
        %v1206 = vpop.permute.xlu0 %1205
        %1207 = vrot.lane.b32.xlu0 %v1148, 127
        %v1208 = vpop.permute.xlu0 %1207
        %v1209 = vsel %vm534, %v1198, %v1200
        %v1210 = vsel %vm534, %v1200, %v1202
        %v1211 = vsel %vm534, %v1204, %v1206
        %v1212 = vsel %vm534, %v1206, %v1208
        %1219 = vrot.lane.b32.xlu0 %v1155, 126
        %v1220 = vpop.permute.xlu0 %1219
        %1221 = vrot.lane.b32.xlu0 %v1156, 126
        %v1222 = vpop.permute.xlu0 %1221
        %1223 = vrot.lane.b32.xlu0 %v1157, 126
        %v1224 = vpop.permute.xlu0 %1223
        %1225 = vrot.lane.b32.xlu0 %v1158, 126
        %v1226 = vpop.permute.xlu0 %1225
        %1227 = vrot.lane.b32.xlu0 %v1159, 126
        %v1228 = vpop.permute.xlu0 %1227
        %1229 = vrot.lane.b32.xlu0 %v1160, 126
        %v1230 = vpop.permute.xlu0 %1229
        %v1231 = vsel %vm636, %v1220, %v1222
        %v1232 = vsel %vm636, %v1222, %v1224
        %v1233 = vsel %vm636, %v1226, %v1228
        %v1234 = vsel %vm636, %v1228, %v1230
        %1241 = vrot.lane.b32.xlu0 %v1161, 112
        %v1242 = vpop.permute.xlu0 %1241
        %1243 = vrot.lane.b32.xlu0 %v1162, 112
        %v1244 = vpop.permute.xlu0 %1243
        %1245 = vrot.lane.b32.xlu0 %v1163, 112
        %v1246 = vpop.permute.xlu0 %1245
        %1247 = vrot.lane.b32.xlu0 %v1164, 112
        %v1248 = vpop.permute.xlu0 %1247
        %1249 = vrot.lane.b32.xlu0 %v1165, 112
        %v1250 = vpop.permute.xlu0 %1249
        %1251 = vrot.lane.b32.xlu0 %v1166, 112
        %v1252 = vpop.permute.xlu0 %1251
        %v1253 = vsel %vm659, %v1242, %v1244
        %v1254 = vsel %vm659, %v1244, %v1246
        %v1255 = vsel %vm659, %v1248, %v1250
        %v1256 = vsel %vm659, %v1250, %v1252
        %1257 = vrot.lane.b32.xlu0 %v1144, 111
        %v1258 = vpop.permute.xlu0 %1257
        %1259 = vrot.lane.b32.xlu0 %v1145, 111
        %v1260 = vpop.permute.xlu0 %1259
        %1261 = vrot.lane.b32.xlu0 %v1147, 111
        %v1262 = vpop.permute.xlu0 %1261
        %1263 = vrot.lane.b32.xlu0 %v1148, 111
        %v1264 = vpop.permute.xlu0 %1263
        %v1265 = vsel %vm490, %v1258, %v1260
        %v1266 = vsel %vm490, %v1262, %v1264
        %1273 = vrot.lane.b32.xlu0 %v1173, 110
        %v1274 = vpop.permute.xlu0 %1273
        %1275 = vrot.lane.b32.xlu0 %v1174, 110
        %v1276 = vpop.permute.xlu0 %1275
        %1277 = vrot.lane.b32.xlu0 %v1175, 110
        %v1278 = vpop.permute.xlu0 %1277
        %1279 = vrot.lane.b32.xlu0 %v1176, 110
        %v1280 = vpop.permute.xlu0 %1279
        %1281 = vrot.lane.b32.xlu0 %v1177, 110
        %v1282 = vpop.permute.xlu0 %1281
        %1283 = vrot.lane.b32.xlu0 %v1178, 110
        %v1284 = vpop.permute.xlu0 %1283
        %v1285 = vsel %vm692, %v1274, %v1276
        %v1286 = vsel %vm692, %v1276, %v1278
        %v1287 = vsel %vm692, %v1280, %v1282
        %v1288 = vsel %vm692, %v1282, %v1284
        %1295 = vrot.lane.b32.xlu0 %v1179, 96
        %v1296 = vpop.permute.xlu0 %1295
        %1297 = vrot.lane.b32.xlu0 %v1180, 96
        %v1298 = vpop.permute.xlu0 %1297
        %1299 = vrot.lane.b32.xlu0 %v1181, 96
        %v1300 = vpop.permute.xlu0 %1299
        %1301 = vrot.lane.b32.xlu0 %v1182, 96
        %v1302 = vpop.permute.xlu0 %1301
        %1303 = vrot.lane.b32.xlu0 %v1183, 96
        %v1304 = vpop.permute.xlu0 %1303
        %1305 = vrot.lane.b32.xlu0 %v1184, 96
        %v1306 = vpop.permute.xlu0 %1305
        %v1307 = vsel %vm715, %v1296, %v1298
        %v1308 = vsel %vm715, %v1298, %v1300
        %v1309 = vsel %vm715, %v1302, %v1304
        %v1310 = vsel %vm715, %v1304, %v1306
        %1317 = vrot.lane.b32.xlu0 %v1167, 95
        %v1318 = vpop.permute.xlu0 %1317
        %1319 = vrot.lane.b32.xlu0 %v1168, 95
        %v1320 = vpop.permute.xlu0 %1319
        %1321 = vrot.lane.b32.xlu0 %v1169, 95
        %v1322 = vpop.permute.xlu0 %1321
        %1323 = vrot.lane.b32.xlu0 %v1170, 95
        %v1324 = vpop.permute.xlu0 %1323
        %1325 = vrot.lane.b32.xlu0 %v1171, 95
        %v1326 = vpop.permute.xlu0 %1325
        %1327 = vrot.lane.b32.xlu0 %v1172, 95
        %v1328 = vpop.permute.xlu0 %1327
        %v1329 = vsel %vm738, %v1318, %v1320
        %v1330 = vsel %vm738, %v1320, %v1322
        %v1331 = vsel %vm738, %v1324, %v1326
        %v1332 = vsel %vm738, %v1326, %v1328
        %1339 = vrot.lane.b32.xlu0 %v1185, 94
        %v1340 = vpop.permute.xlu0 %1339
        %1341 = vrot.lane.b32.xlu0 %v1186, 94
        %v1342 = vpop.permute.xlu0 %1341
        %1343 = vrot.lane.b32.xlu0 %v1187, 94
        %v1344 = vpop.permute.xlu0 %1343
        %1345 = vrot.lane.b32.xlu0 %v1188, 94
        %v1346 = vpop.permute.xlu0 %1345
        %1347 = vrot.lane.b32.xlu0 %v1189, 94
        %v1348 = vpop.permute.xlu0 %1347
        %1349 = vrot.lane.b32.xlu0 %v1190, 94
        %v1350 = vpop.permute.xlu0 %1349
        %v1351 = vsel %vm761, %v1340, %v1342
        %v1352 = vsel %vm761, %v1342, %v1344
        %v1353 = vsel %vm761, %v1346, %v1348
        %v1354 = vsel %vm761, %v1348, %v1350
        %v1355 = vld [vmem:[%s3] sm:$0xff]
        %v1356 = vld [vmem:[%s3 + $0x8] sm:$0xf]
        %v1357 = vld [vmem:[%s3 + $0xc] sm:$0xff]
        %v1358 = vld [vmem:[%s3 + $0x14] sm:$0xf]
        %v1359 = vld [vmem:[%s3 + $0x18] sm:$0xff]
        %v1360 = vld [vmem:[%s3 + $0x20] sm:$0xf]
        %v1361 = vld [vmem:[%s3 + $0x24] sm:$0xff]
        %v1362 = vld [vmem:[%s3 + $0x2c] sm:$0xf]
        %v1363 = vld [vmem:[%s4] sm:$0xff]
        %v1364 = vld [vmem:[%s4 + $0x8] sm:$0xff]
        %v1365 = vld [vmem:[%s4 + $0x10] sm:$0xff]
        %v1366 = vld [vmem:[%s4 + $0x18] sm:$0xff]
        %1368 = vset.pattern.permute.xlu0 0
        %1369 = vperm.xlu0 %1368, %v1363
        %v1370 = vpop.permute.xlu0 %1369
        %1373 = vset.pattern.permute.xlu0 0
        %1374 = vperm.xlu0 %1373, %v1364
        %v1375 = vpop.permute.xlu0 %1374
        %1378 = vset.pattern.permute.xlu0 0
        %1379 = vperm.xlu0 %1378, %v1365
        %v1380 = vpop.permute.xlu0 %1379
        %1383 = vset.pattern.permute.xlu0 0
        %1384 = vperm.xlu0 %1383, %v1366
        %v1385 = vpop.permute.xlu0 %1384
        %v1395 = vunpack.c.l.b16 %v1355
        %v1396 = vunpack.c.h.b16 %v1355
        %v1397 = vunpack.c.l.b16 %v1356
        %v1398 = vunpack.c.l.b16 %v1357
        %v1399 = vunpack.c.h.b16 %v1357
        %v1400 = vunpack.c.l.b16 %v1358
        %v1401 = vunpack.c.l.b16 %v1359
        %v1402 = vunpack.c.h.b16 %v1359
        %v1403 = vunpack.c.l.b16 %v1360
        %v1404 = vunpack.c.l.b16 %v1361
        %v1405 = vunpack.c.h.b16 %v1361
        %v1406 = vunpack.c.l.b16 %v1362
        %v1407 = vpack.c.b16 %v1398, %v1395
        %v1408 = vpack.c.b16 %v1399, %v1396
        %v1409 = vpack.c.b16 %v1400, %v1397
        %v1410 = vpack.c.b16 %v1404, %v1401
        %v1411 = vpack.c.b16 %v1405, %v1402
        %v1412 = vpack.c.b16 %v1406, %v1403
        %1423 = vrot.lane.b32.xlu0 %v1149, 17
        %v1424 = vpop.permute.xlu0 %1423
        %1425 = vrot.lane.b32.xlu0 %v1150, 17
        %v1426 = vpop.permute.xlu0 %1425
        %1427 = vrot.lane.b32.xlu0 %v1151, 17
        %v1428 = vpop.permute.xlu0 %1427
        %1429 = vrot.lane.b32.xlu0 %v1152, 17
        %v1430 = vpop.permute.xlu0 %1429
        %1431 = vrot.lane.b32.xlu0 %v1153, 17
        %v1432 = vpop.permute.xlu0 %1431
        %1433 = vrot.lane.b32.xlu0 %v1154, 17
        %v1434 = vpop.permute.xlu0 %1433
        %1435 = vrot.lane.b32.xlu0 %v1209, 17
        %v1436 = vpop.permute.xlu0 %1435
        %1437 = vrot.lane.b32.xlu0 %v1210, 17
        %v1438 = vpop.permute.xlu0 %1437
        %1439 = vrot.lane.b32.xlu0 %v1202, 17
        %v1440 = vpop.permute.xlu0 %1439
        %1441 = vrot.lane.b32.xlu0 %v1211, 17
        %v1442 = vpop.permute.xlu0 %1441
        %1443 = vrot.lane.b32.xlu0 %v1212, 17
        %v1444 = vpop.permute.xlu0 %1443
        %1445 = vrot.lane.b32.xlu0 %v1208, 17
        %v1446 = vpop.permute.xlu0 %1445
        %1447 = vrot.lane.b32.xlu0 %v1231, 17
        %v1448 = vpop.permute.xlu0 %1447
        %1449 = vrot.lane.b32.xlu0 %v1232, 17
        %v1450 = vpop.permute.xlu0 %1449
        %1451 = vrot.lane.b32.xlu0 %v1224, 17
        %v1452 = vpop.permute.xlu0 %1451
        %1453 = vrot.lane.b32.xlu0 %v1233, 17
        %v1454 = vpop.permute.xlu0 %1453
        %1455 = vrot.lane.b32.xlu0 %v1234, 17
        %v1456 = vpop.permute.xlu0 %1455
        %1457 = vrot.lane.b32.xlu0 %v1230, 17
        %v1458 = vpop.permute.xlu0 %1457
        %1459 = vrot.lane.b32.xlu0 %v1253, 17
        %v1460 = vpop.permute.xlu0 %1459
        %1461 = vrot.lane.b32.xlu0 %v1254, 17
        %v1462 = vpop.permute.xlu0 %1461
        %1463 = vrot.lane.b32.xlu0 %v1246, 17
        %v1464 = vpop.permute.xlu0 %1463
        %1465 = vrot.lane.b32.xlu0 %v1255, 17
        %v1466 = vpop.permute.xlu0 %1465
        %1467 = vrot.lane.b32.xlu0 %v1256, 17
        %v1468 = vpop.permute.xlu0 %1467
        %1469 = vrot.lane.b32.xlu0 %v1252, 17
        %v1470 = vpop.permute.xlu0 %1469
        %1471 = vrot.lane.b32.xlu0 %v1258, 17
        %v1472 = vpop.permute.xlu0 %1471
        %1473 = vrot.lane.b32.xlu0 %v1265, 17
        %v1474 = vpop.permute.xlu0 %1473
        %1475 = vrot.lane.b32.xlu0 %v1260, 17
        %v1476 = vpop.permute.xlu0 %1475
        %1477 = vrot.lane.b32.xlu0 %v1262, 17
        %v1478 = vpop.permute.xlu0 %1477
        %1479 = vrot.lane.b32.xlu0 %v1266, 17
        %v1480 = vpop.permute.xlu0 %1479
        %1481 = vrot.lane.b32.xlu0 %v1264, 17
        %v1482 = vpop.permute.xlu0 %1481
        %1483 = vrot.lane.b32.xlu0 %v1274, 17
        %v1484 = vpop.permute.xlu0 %1483
        %1485 = vrot.lane.b32.xlu0 %v1285, 17
        %v1486 = vpop.permute.xlu0 %1485
        %1487 = vrot.lane.b32.xlu0 %v1286, 17
        %v1488 = vpop.permute.xlu0 %1487
        %1489 = vrot.lane.b32.xlu0 %v1280, 17
        %v1490 = vpop.permute.xlu0 %1489
        %1491 = vrot.lane.b32.xlu0 %v1287, 17
        %v1492 = vpop.permute.xlu0 %1491
        %1493 = vrot.lane.b32.xlu0 %v1288, 17
        %v1494 = vpop.permute.xlu0 %1493
        %1495 = vrot.lane.b32.xlu0 %v1296, 17
        %v1496 = vpop.permute.xlu0 %1495
        %1497 = vrot.lane.b32.xlu0 %v1307, 17
        %v1498 = vpop.permute.xlu0 %1497
        %1499 = vrot.lane.b32.xlu0 %v1308, 17
        %v1500 = vpop.permute.xlu0 %1499
        %1501 = vrot.lane.b32.xlu0 %v1302, 17
        %v1502 = vpop.permute.xlu0 %1501
        %1503 = vrot.lane.b32.xlu0 %v1309, 17
        %v1504 = vpop.permute.xlu0 %1503
        %1505 = vrot.lane.b32.xlu0 %v1310, 17
        %v1506 = vpop.permute.xlu0 %1505
        %1507 = vrot.lane.b32.xlu0 %v1318, 17
        %v1508 = vpop.permute.xlu0 %1507
        %1509 = vrot.lane.b32.xlu0 %v1329, 17
        %v1510 = vpop.permute.xlu0 %1509
        %1511 = vrot.lane.b32.xlu0 %v1330, 17
        %v1512 = vpop.permute.xlu0 %1511
        %1513 = vrot.lane.b32.xlu0 %v1324, 17
        %v1514 = vpop.permute.xlu0 %1513
        %1515 = vrot.lane.b32.xlu0 %v1331, 17
        %v1516 = vpop.permute.xlu0 %1515
        %1517 = vrot.lane.b32.xlu0 %v1332, 17
        %v1518 = vpop.permute.xlu0 %1517
        %1519 = vrot.lane.b32.xlu0 %v1340, 17
        %v1520 = vpop.permute.xlu0 %1519
        %1521 = vrot.lane.b32.xlu0 %v1351, 17
        %v1522 = vpop.permute.xlu0 %1521
        %1523 = vrot.lane.b32.xlu0 %v1352, 17
        %v1524 = vpop.permute.xlu0 %1523
        %1525 = vrot.lane.b32.xlu0 %v1346, 17
        %v1526 = vpop.permute.xlu0 %1525
        %1527 = vrot.lane.b32.xlu0 %v1353, 17
        %v1528 = vpop.permute.xlu0 %1527
        %1529 = vrot.lane.b32.xlu0 %v1354, 17
        %v1530 = vpop.permute.xlu0 %1529
        %v1531 = vsel %vm585, %v1424, %v1426
        %v1532 = vsel %vm585, %v1426, %v1428
        %v1533 = vsel %vm585, %v1430, %v1432
        %v1534 = vsel %vm585, %v1432, %v1434
        %v1535 = vsel %vm585, %v1436, %v1438
        %v1536 = vsel %vm585, %v1438, %v1440
        %v1537 = vsel %vm585, %v1442, %v1444
        %v1538 = vsel %vm585, %v1444, %v1446
        %v1539 = vsel %vm585, %v1448, %v1450
        %v1540 = vsel %vm585, %v1450, %v1452
        %v1541 = vsel %vm585, %v1454, %v1456
        %v1542 = vsel %vm585, %v1456, %v1458
        %v1543 = vsel %vm585, %v1460, %v1462
        %v1544 = vsel %vm585, %v1462, %v1464
        %v1545 = vsel %vm585, %v1466, %v1468
        %v1546 = vsel %vm585, %v1468, %v1470
        %v1547 = vsel %vm585, %v1472, %v1474
        %v1548 = vsel %vm585, %v1474, %v1476
        %v1549 = vsel %vm585, %v1478, %v1480
        %v1550 = vsel %vm585, %v1480, %v1482
        %v1551 = vsel %vm585, %v1484, %v1486
        %v1552 = vsel %vm585, %v1486, %v1488
        %v1553 = vsel %vm585, %v1490, %v1492
        %v1554 = vsel %vm585, %v1492, %v1494
        %v1555 = vsel %vm585, %v1496, %v1498
        %v1556 = vsel %vm585, %v1498, %v1500
        %v1557 = vsel %vm585, %v1502, %v1504
        %v1558 = vsel %vm585, %v1504, %v1506
        %v1559 = vsel %vm585, %v1508, %v1510
        %v1560 = vsel %vm585, %v1510, %v1512
        %v1561 = vsel %vm585, %v1514, %v1516
        %v1562 = vsel %vm585, %v1516, %v1518
        %v1563 = vsel %vm585, %v1520, %v1522
        %v1564 = vsel %vm585, %v1522, %v1524
        %v1565 = vsel %vm585, %v1526, %v1528
        %v1566 = vsel %vm585, %v1528, %v1530
        %v1604 = vsel %vm1014, %v1409, 0
        %v1607 = vsel %vm1014, %v1412, 0
        %1609 = vmatprep.subr.bf16.mxu0 %v1532
        %1610 = vmatpush1.bf16.msra.mxu0 %v1531
        %1611 = vmatprep.subr.bf16.mxu0 %v1534
        %1612 = vmatpush1.bf16.msra.mxu0 %v1533
        %1613 = vmatprep.subr.bf16.mxu0 %v1536
        %1614 = vmatpush1.bf16.msra.mxu0 %v1535
        %1615 = vmatprep.subr.bf16.mxu0 %v1538
        %1616 = vmatpush1.bf16.msra.mxu0 %v1537
        %1617 = vmatprep.subr.bf16.mxu0 %v1540
        %1618 = vmatpush1.bf16.msra.mxu0 %v1539
        %1619 = vmatprep.subr.bf16.mxu0 %v1542
        %1620 = vmatpush1.bf16.msra.mxu0 %v1541
        %1621 = vmatprep.subr.bf16.mxu0 %v1544
        %1622 = vmatpush1.bf16.msra.mxu0 %v1543
        %1623 = vmatprep.subr.bf16.mxu0 %v1546
        %1624 = vmatpush1.bf16.msra.mxu0 %v1545
        %1625 = vmatprep.subr.bf16.mxu0 %v1548
        %1626 = vmatpush1.bf16.msra.mxu0 %v1547
        %1627 = vmatprep.subr.bf16.mxu0 %v1550
        %1628 = vmatpush1.bf16.msra.mxu0 %v1549
        %1629 = vmatprep.subr.bf16.mxu0 %v1552
        %1630 = vmatpush1.bf16.msra.mxu0 %v1551
        %1631 = vmatprep.subr.bf16.mxu0 %v1554
        %1632 = vmatpush1.bf16.msra.mxu0 %v1553
        %1633 = vmatprep.subr.bf16.mxu0 %v1556
        %1634 = vmatpush1.bf16.msra.mxu0 %v1555
        %1635 = vmatprep.subr.bf16.mxu0 %v1558
        %1636 = vmatpush1.bf16.msra.mxu0 %v1557
        %1637 = vmatprep.subr.bf16.mxu0 %v1560
        %1638 = vmatpush1.bf16.msra.mxu0 %v1559
        %1639 = vmatprep.subr.bf16.mxu0 %v1562
        %1640 = vmatpush1.bf16.msra.mxu0 %v1561
        %1641 = vmatprep.mubr.bf16.mxu0 %v1408
        %1642 = vmatmul.mubr.bf16.gmra.mrb[0].mxu0 %v1407
        %v1643 = vpop.f32.mrb[0].mxu0
        %v1644 = vadd.f32 %v1370, %v1643
        %v1645 = vpop.f32.mrb[0].mxu0
        %v1646 = vadd.f32 %v1370, %v1645
        %v1647 = vpop.f32.mrb[0].mxu0
        %v1648 = vadd.f32 %v1375, %v1647
        %v1649 = vpop.f32.mrb[0].mxu0
        %v1650 = vadd.f32 %v1375, %v1649
        %1651 = vmatprep.mubr.bf16.mxu0 %v1411
        %1652 = vmatmul.mubr.bf16.gmra.mrb[0].mxu0 %v1410
        %v1653 = vpop.f32.mrb[0].mxu0
        %v1654 = vadd.f32 %v1380, %v1653
        %v1655 = vpop.f32.mrb[0].mxu0
        %v1656 = vadd.f32 %v1380, %v1655
        %v1657 = vpop.f32.mrb[0].mxu0
        %v1658 = vadd.f32 %v1385, %v1657
        %v1659 = vpop.f32.mrb[0].mxu0
        %v1660 = vadd.f32 %v1385, %v1659
        %1661 = vdwg.mxu0
        %1662 = vmatprep.subr.bf16.mxu0 %v1564
        %1663 = vmatpush1.bf16.msra.mxu0 %v1563
        %1664 = vmatprep.subr.bf16.mxu0 %v1566
        %1665 = vmatpush1.bf16.msra.mxu0 %v1565
        %1666 = vmatprep.subr.bf16.mxu0 0
        %1667 = vmatpush1.bf16.msra.mxu0 0
        %1668 = vmatprep.subr.bf16.mxu0 0
        %1669 = vmatpush1.bf16.msra.mxu0 0
        %1670 = vmatprep.subr.bf16.mxu0 0
        %1671 = vmatpush1.bf16.msra.mxu0 0
        %1672 = vmatprep.subr.bf16.mxu0 0
        %1673 = vmatpush1.bf16.msra.mxu0 0
        %1674 = vmatprep.subr.bf16.mxu0 0
        %1675 = vmatpush1.bf16.msra.mxu0 0
        %1676 = vmatprep.subr.bf16.mxu0 0
        %1677 = vmatpush1.bf16.msra.mxu0 0
        %1678 = vmatprep.subr.bf16.mxu0 0
        %1679 = vmatpush1.bf16.msra.mxu0 0
        %1680 = vmatprep.subr.bf16.mxu0 0
        %1681 = vmatpush1.bf16.msra.mxu0 0
        %1682 = vmatprep.subr.bf16.mxu0 0
        %1683 = vmatpush1.bf16.msra.mxu0 0
        %1684 = vmatprep.subr.bf16.mxu0 0
        %1685 = vmatpush1.bf16.msra.mxu0 0
        %1686 = vmatprep.subr.bf16.mxu0 0
        %1687 = vmatpush1.bf16.msra.mxu0 0
        %1688 = vmatprep.subr.bf16.mxu0 0
        %1689 = vmatpush1.bf16.msra.mxu0 0
        %1690 = vmatprep.subr.bf16.mxu0 0
        %1691 = vmatpush1.bf16.msra.mxu0 0
        %1692 = vmatprep.subr.bf16.mxu0 0
        %1693 = vmatpush1.bf16.msra.mxu0 0
        %1694 = vmatprep.mubr.bf16.mxu0 0
        %1695 = vmatmul.mubr.bf16.gmra.mrb[0].mxu0 %v1604
        %v1696 = vpop.f32.mrb[0].mxu0
        %v1697 = vadd.f32 %v1644, %v1696
        %v1698 = vpop.f32.mrb[0].mxu0
        %v1699 = vadd.f32 %v1646, %v1698
        %v1700 = vpop.f32.mrb[0].mxu0
        %v1701 = vadd.f32 %v1648, %v1700
        %v1702 = vpop.f32.mrb[0].mxu0
        %v1703 = vadd.f32 %v1650, %v1702
        %1704 = vmatprep.mubr.bf16.mxu0 0
        %1705 = vmatmul.mubr.bf16.gmra.mrb[0].mxu0 %v1607
        %v1706 = vpop.f32.mrb[0].mxu0
        %v1707 = vadd.f32 %v1654, %v1706
        %v1708 = vpop.f32.mrb[0].mxu0
        %v1709 = vadd.f32 %v1656, %v1708
        %v1710 = vpop.f32.mrb[0].mxu0
        %v1711 = vadd.f32 %v1658, %v1710
        %v1712 = vpop.f32.mrb[0].mxu0
        %v1713 = vadd.f32 %v1660, %v1712
        %1714 = vdwg.mxu0
        %v1715 = vmax.f32 %v1697, 0.0
        %v1716 = vmax.f32 %v1699, 0.0
        %v1717 = vmax.f32 %v1701, 0.0
        %v1718 = vmax.f32 %v1703, 0.0
        %v1719 = vmax.f32 %v1707, 0.0
        %v1720 = vmax.f32 %v1709, 0.0
        %v1721 = vmax.f32 %v1711, 0.0
        %v1722 = vmax.f32 %v1713, 0.0
        %v1723 = vpack.c.bf16 %v1717, %v1715
        %v1724 = vpack.c.bf16 %v1718, %v1716
        %v1725 = vpack.c.bf16 %v1721, %v1719
        %v1726 = vpack.c.bf16 %v1722, %v1720
        %1727 = vst [vmem:[#allocation2 + $0x8] sm:$0xff] %v1723
        %1728 = vst [vmem:[#allocation2 + $0x10] sm:$0xff] %v1724
        %1729 = vst [vmem:[#allocation2 + $0x28] sm:$0xff] %v1725
        %1730 = vst [vmem:[#allocation2 + $0x30] sm:$0xff] %v1726
        %v1731 = vld [vmem:[#allocation2] sm:$0xff]
        %v1732 = vld [vmem:[#allocation2 + $0x8] sm:$0xff]
        %v1733 = vld [vmem:[#allocation2 + $0x10] sm:$0xff]
        %v1734 = vld [vmem:[#allocation2 + $0x20] sm:$0xff]
        %v1735 = vld [vmem:[#allocation2 + $0x28] sm:$0xff]
        %v1736 = vld [vmem:[#allocation2 + $0x30] sm:$0xff]
        %v1737 = vsel %vm492, %v1731, 0
        %v1738 = vsel %vm493, %v1732, 0
        %v1739 = vsel %vm494, %v1733, 0
        %v1740 = vsel %vm492, %v1734, 0
        %v1741 = vsel %vm493, %v1735, 0
        %v1742 = vsel %vm494, %v1736, 0
        %v1743 = vsel %vm521, %v1731, 0
        %v1744 = vsel %vm522, %v1732, 0
        %v1745 = vsel %vm523, %v1733, 0
        %v1746 = vsel %vm521, %v1734, 0
        %v1747 = vsel %vm522, %v1735, 0
        %v1748 = vsel %vm523, %v1736, 0
        %v1749 = vsel %vm536, %v1731, 0
        %v1750 = vsel %vm537, %v1732, 0
        %v1751 = vsel %vm538, %v1733, 0
        %v1752 = vsel %vm536, %v1734, 0
        %v1753 = vsel %vm537, %v1735, 0
        %v1754 = vsel %vm538, %v1736, 0
        %v1755 = vld [vmem:[#allocation2 + $0x8] sm:$0xff]
        %v1756 = vld [vmem:[#allocation2 + $0x10] sm:$0xff]
        %v1757 = vld [vmem:[#allocation2 + $0x18] sm:$0xff]
        %v1758 = vld [vmem:[#allocation2 + $0x28] sm:$0xff]
        %v1759 = vld [vmem:[#allocation2 + $0x30] sm:$0xff]
        %v1760 = vld [vmem:[#allocation2 + $0x38] sm:$0xff]
        %v1761 = vsel %vm557, %v1755, 0
        %v1762 = vsel %vm558, %v1756, 0
        %v1763 = vsel %vm559, %v1757, 0
        %v1764 = vsel %vm557, %v1758, 0
        %v1765 = vsel %vm558, %v1759, 0
        %v1766 = vsel %vm559, %v1760, 0
        %v1767 = vsel %vm572, %v1755, 0
        %v1768 = vsel %vm573, %v1756, 0
        %v1769 = vsel %vm574, %v1757, 0
        %v1770 = vsel %vm572, %v1758, 0
        %v1771 = vsel %vm573, %v1759, 0
        %v1772 = vsel %vm574, %v1760, 0
        %v1773 = vsel %vm587, %v1755, 0
        %v1774 = vsel %vm588, %v1756, 0
        %v1775 = vsel %vm589, %v1757, 0
        %v1776 = vsel %vm587, %v1758, 0
        %v1777 = vsel %vm588, %v1759, 0
        %v1778 = vsel %vm589, %v1760, 0
        %1785 = vrot.lane.b32.xlu0 %v1731, 127
        %v1786 = vpop.permute.xlu0 %1785
        %1787 = vrot.lane.b32.xlu0 %v1732, 127
        %v1788 = vpop.permute.xlu0 %1787
        %1789 = vrot.lane.b32.xlu0 %v1733, 127
        %v1790 = vpop.permute.xlu0 %1789
        %1791 = vrot.lane.b32.xlu0 %v1734, 127
        %v1792 = vpop.permute.xlu0 %1791
        %1793 = vrot.lane.b32.xlu0 %v1735, 127
        %v1794 = vpop.permute.xlu0 %1793
        %1795 = vrot.lane.b32.xlu0 %v1736, 127
        %v1796 = vpop.permute.xlu0 %1795
        %v1797 = vsel %vm534, %v1786, %v1788
        %v1798 = vsel %vm534, %v1788, %v1790
        %v1799 = vsel %vm534, %v1792, %v1794
        %v1800 = vsel %vm534, %v1794, %v1796
        %1807 = vrot.lane.b32.xlu0 %v1743, 126
        %v1808 = vpop.permute.xlu0 %1807
        %1809 = vrot.lane.b32.xlu0 %v1744, 126
        %v1810 = vpop.permute.xlu0 %1809
        %1811 = vrot.lane.b32.xlu0 %v1745, 126
        %v1812 = vpop.permute.xlu0 %1811
        %1813 = vrot.lane.b32.xlu0 %v1746, 126
        %v1814 = vpop.permute.xlu0 %1813
        %1815 = vrot.lane.b32.xlu0 %v1747, 126
        %v1816 = vpop.permute.xlu0 %1815
        %1817 = vrot.lane.b32.xlu0 %v1748, 126
        %v1818 = vpop.permute.xlu0 %1817
        %v1819 = vsel %vm636, %v1808, %v1810
        %v1820 = vsel %vm636, %v1810, %v1812
        %v1821 = vsel %vm636, %v1814, %v1816
        %v1822 = vsel %vm636, %v1816, %v1818
        %1829 = vrot.lane.b32.xlu0 %v1749, 112
        %v1830 = vpop.permute.xlu0 %1829
        %1831 = vrot.lane.b32.xlu0 %v1750, 112
        %v1832 = vpop.permute.xlu0 %1831
        %1833 = vrot.lane.b32.xlu0 %v1751, 112
        %v1834 = vpop.permute.xlu0 %1833
        %1835 = vrot.lane.b32.xlu0 %v1752, 112
        %v1836 = vpop.permute.xlu0 %1835
        %1837 = vrot.lane.b32.xlu0 %v1753, 112
        %v1838 = vpop.permute.xlu0 %1837
        %1839 = vrot.lane.b32.xlu0 %v1754, 112
        %v1840 = vpop.permute.xlu0 %1839
        %v1841 = vsel %vm659, %v1830, %v1832
        %v1842 = vsel %vm659, %v1832, %v1834
        %v1843 = vsel %vm659, %v1836, %v1838
        %v1844 = vsel %vm659, %v1838, %v1840
        %1845 = vrot.lane.b32.xlu0 %v1732, 111
        %v1846 = vpop.permute.xlu0 %1845
        %1847 = vrot.lane.b32.xlu0 %v1733, 111
        %v1848 = vpop.permute.xlu0 %1847
        %1849 = vrot.lane.b32.xlu0 %v1735, 111
        %v1850 = vpop.permute.xlu0 %1849
        %1851 = vrot.lane.b32.xlu0 %v1736, 111
        %v1852 = vpop.permute.xlu0 %1851
        %v1853 = vsel %vm490, %v1846, %v1848
        %v1854 = vsel %vm490, %v1850, %v1852
        %1861 = vrot.lane.b32.xlu0 %v1761, 110
        %v1862 = vpop.permute.xlu0 %1861
        %1863 = vrot.lane.b32.xlu0 %v1762, 110
        %v1864 = vpop.permute.xlu0 %1863
        %1865 = vrot.lane.b32.xlu0 %v1763, 110
        %v1866 = vpop.permute.xlu0 %1865
        %1867 = vrot.lane.b32.xlu0 %v1764, 110
        %v1868 = vpop.permute.xlu0 %1867
        %1869 = vrot.lane.b32.xlu0 %v1765, 110
        %v1870 = vpop.permute.xlu0 %1869
        %1871 = vrot.lane.b32.xlu0 %v1766, 110
        %v1872 = vpop.permute.xlu0 %1871
        %v1873 = vsel %vm692, %v1862, %v1864
        %v1874 = vsel %vm692, %v1864, %v1866
        %v1875 = vsel %vm692, %v1868, %v1870
        %v1876 = vsel %vm692, %v1870, %v1872
        %1883 = vrot.lane.b32.xlu0 %v1767, 96
        %v1884 = vpop.permute.xlu0 %1883
        %1885 = vrot.lane.b32.xlu0 %v1768, 96
        %v1886 = vpop.permute.xlu0 %1885
        %1887 = vrot.lane.b32.xlu0 %v1769, 96
        %v1888 = vpop.permute.xlu0 %1887
        %1889 = vrot.lane.b32.xlu0 %v1770, 96
        %v1890 = vpop.permute.xlu0 %1889
        %1891 = vrot.lane.b32.xlu0 %v1771, 96
        %v1892 = vpop.permute.xlu0 %1891
        %1893 = vrot.lane.b32.xlu0 %v1772, 96
        %v1894 = vpop.permute.xlu0 %1893
        %v1895 = vsel %vm715, %v1884, %v1886
        %v1896 = vsel %vm715, %v1886, %v1888
        %v1897 = vsel %vm715, %v1890, %v1892
        %v1898 = vsel %vm715, %v1892, %v1894
        %1905 = vrot.lane.b32.xlu0 %v1755, 95
        %v1906 = vpop.permute.xlu0 %1905
        %1907 = vrot.lane.b32.xlu0 %v1756, 95
        %v1908 = vpop.permute.xlu0 %1907
        %1909 = vrot.lane.b32.xlu0 %v1757, 95
        %v1910 = vpop.permute.xlu0 %1909
        %1911 = vrot.lane.b32.xlu0 %v1758, 95
        %v1912 = vpop.permute.xlu0 %1911
        %1913 = vrot.lane.b32.xlu0 %v1759, 95
        %v1914 = vpop.permute.xlu0 %1913
        %1915 = vrot.lane.b32.xlu0 %v1760, 95
        %v1916 = vpop.permute.xlu0 %1915
        %v1917 = vsel %vm738, %v1906, %v1908
        %v1918 = vsel %vm738, %v1908, %v1910
        %v1919 = vsel %vm738, %v1912, %v1914
        %v1920 = vsel %vm738, %v1914, %v1916
        %1927 = vrot.lane.b32.xlu0 %v1773, 94
        %v1928 = vpop.permute.xlu0 %1927
        %1929 = vrot.lane.b32.xlu0 %v1774, 94
        %v1930 = vpop.permute.xlu0 %1929
        %1931 = vrot.lane.b32.xlu0 %v1775, 94
        %v1932 = vpop.permute.xlu0 %1931
        %1933 = vrot.lane.b32.xlu0 %v1776, 94
        %v1934 = vpop.permute.xlu0 %1933
        %1935 = vrot.lane.b32.xlu0 %v1777, 94
        %v1936 = vpop.permute.xlu0 %1935
        %1937 = vrot.lane.b32.xlu0 %v1778, 94
        %v1938 = vpop.permute.xlu0 %1937
        %v1939 = vsel %vm761, %v1928, %v1930
        %v1940 = vsel %vm761, %v1930, %v1932
        %v1941 = vsel %vm761, %v1934, %v1936
        %v1942 = vsel %vm761, %v1936, %v1938
        %v1943 = vld [vmem:[%s5] sm:$0xff]
        %v1944 = vld [vmem:[%s5 + $0x8] sm:$0xf]
        %v1945 = vld [vmem:[%s5 + $0xc] sm:$0xff]
        %v1946 = vld [vmem:[%s5 + $0x14] sm:$0xf]
        %v1947 = vld [vmem:[%s5 + $0x18] sm:$0xff]
        %v1948 = vld [vmem:[%s5 + $0x20] sm:$0xf]
        %v1949 = vld [vmem:[%s5 + $0x24] sm:$0xff]
        %v1950 = vld [vmem:[%s5 + $0x2c] sm:$0xf]
        %v1951 = vld [vmem:[%s6] sm:$0xff]
        %v1952 = vld [vmem:[%s6 + $0x8] sm:$0xff]
        %v1953 = vld [vmem:[%s6 + $0x10] sm:$0xff]
        %v1954 = vld [vmem:[%s6 + $0x18] sm:$0xff]
        %1956 = vset.pattern.permute.xlu0 0
        %1957 = vperm.xlu0 %1956, %v1951
        %v1958 = vpop.permute.xlu0 %1957
        %1961 = vset.pattern.permute.xlu0 0
        %1962 = vperm.xlu0 %1961, %v1952
        %v1963 = vpop.permute.xlu0 %1962
        %1966 = vset.pattern.permute.xlu0 0
        %1967 = vperm.xlu0 %1966, %v1953
        %v1968 = vpop.permute.xlu0 %1967
        %1971 = vset.pattern.permute.xlu0 0
        %1972 = vperm.xlu0 %1971, %v1954
        %v1973 = vpop.permute.xlu0 %1972
        %v1983 = vunpack.c.l.b16 %v1943
        %v1984 = vunpack.c.h.b16 %v1943
        %v1985 = vunpack.c.l.b16 %v1944
        %v1986 = vunpack.c.l.b16 %v1945
        %v1987 = vunpack.c.h.b16 %v1945
        %v1988 = vunpack.c.l.b16 %v1946
        %v1989 = vunpack.c.l.b16 %v1947
        %v1990 = vunpack.c.h.b16 %v1947
        %v1991 = vunpack.c.l.b16 %v1948
        %v1992 = vunpack.c.l.b16 %v1949
        %v1993 = vunpack.c.h.b16 %v1949
        %v1994 = vunpack.c.l.b16 %v1950
        %v1995 = vpack.c.b16 %v1986, %v1983
        %v1996 = vpack.c.b16 %v1987, %v1984
        %v1997 = vpack.c.b16 %v1988, %v1985
        %v1998 = vpack.c.b16 %v1992, %v1989
        %v1999 = vpack.c.b16 %v1993, %v1990
        %v2000 = vpack.c.b16 %v1994, %v1991
        %2011 = vrot.lane.b32.xlu0 %v1737, 17
        %v2012 = vpop.permute.xlu0 %2011
        %2013 = vrot.lane.b32.xlu0 %v1738, 17
        %v2014 = vpop.permute.xlu0 %2013
        %2015 = vrot.lane.b32.xlu0 %v1739, 17
        %v2016 = vpop.permute.xlu0 %2015
        %2017 = vrot.lane.b32.xlu0 %v1740, 17
        %v2018 = vpop.permute.xlu0 %2017
        %2019 = vrot.lane.b32.xlu0 %v1741, 17
        %v2020 = vpop.permute.xlu0 %2019
        %2021 = vrot.lane.b32.xlu0 %v1742, 17
        %v2022 = vpop.permute.xlu0 %2021
        %2023 = vrot.lane.b32.xlu0 %v1797, 17
        %v2024 = vpop.permute.xlu0 %2023
        %2025 = vrot.lane.b32.xlu0 %v1798, 17
        %v2026 = vpop.permute.xlu0 %2025
        %2027 = vrot.lane.b32.xlu0 %v1790, 17
        %v2028 = vpop.permute.xlu0 %2027
        %2029 = vrot.lane.b32.xlu0 %v1799, 17
        %v2030 = vpop.permute.xlu0 %2029
        %2031 = vrot.lane.b32.xlu0 %v1800, 17
        %v2032 = vpop.permute.xlu0 %2031
        %2033 = vrot.lane.b32.xlu0 %v1796, 17
        %v2034 = vpop.permute.xlu0 %2033
        %2035 = vrot.lane.b32.xlu0 %v1819, 17
        %v2036 = vpop.permute.xlu0 %2035
        %2037 = vrot.lane.b32.xlu0 %v1820, 17
        %v2038 = vpop.permute.xlu0 %2037
        %2039 = vrot.lane.b32.xlu0 %v1812, 17
        %v2040 = vpop.permute.xlu0 %2039
        %2041 = vrot.lane.b32.xlu0 %v1821, 17
        %v2042 = vpop.permute.xlu0 %2041
        %2043 = vrot.lane.b32.xlu0 %v1822, 17
        %v2044 = vpop.permute.xlu0 %2043
        %2045 = vrot.lane.b32.xlu0 %v1818, 17
        %v2046 = vpop.permute.xlu0 %2045
        %2047 = vrot.lane.b32.xlu0 %v1841, 17
        %v2048 = vpop.permute.xlu0 %2047
        %2049 = vrot.lane.b32.xlu0 %v1842, 17
        %v2050 = vpop.permute.xlu0 %2049
        %2051 = vrot.lane.b32.xlu0 %v1834, 17
        %v2052 = vpop.permute.xlu0 %2051
        %2053 = vrot.lane.b32.xlu0 %v1843, 17
        %v2054 = vpop.permute.xlu0 %2053
        %2055 = vrot.lane.b32.xlu0 %v1844, 17
        %v2056 = vpop.permute.xlu0 %2055
        %2057 = vrot.lane.b32.xlu0 %v1840, 17
        %v2058 = vpop.permute.xlu0 %2057
        %2059 = vrot.lane.b32.xlu0 %v1846, 17
        %v2060 = vpop.permute.xlu0 %2059
        %2061 = vrot.lane.b32.xlu0 %v1853, 17
        %v2062 = vpop.permute.xlu0 %2061
        %2063 = vrot.lane.b32.xlu0 %v1848, 17
        %v2064 = vpop.permute.xlu0 %2063
        %2065 = vrot.lane.b32.xlu0 %v1850, 17
        %v2066 = vpop.permute.xlu0 %2065
        %2067 = vrot.lane.b32.xlu0 %v1854, 17
        %v2068 = vpop.permute.xlu0 %2067
        %2069 = vrot.lane.b32.xlu0 %v1852, 17
        %v2070 = vpop.permute.xlu0 %2069
        %2071 = vrot.lane.b32.xlu0 %v1862, 17
        %v2072 = vpop.permute.xlu0 %2071
        %2073 = vrot.lane.b32.xlu0 %v1873, 17
        %v2074 = vpop.permute.xlu0 %2073
        %2075 = vrot.lane.b32.xlu0 %v1874, 17
        %v2076 = vpop.permute.xlu0 %2075
        %2077 = vrot.lane.b32.xlu0 %v1868, 17
        %v2078 = vpop.permute.xlu0 %2077
        %2079 = vrot.lane.b32.xlu0 %v1875, 17
        %v2080 = vpop.permute.xlu0 %2079
        %2081 = vrot.lane.b32.xlu0 %v1876, 17
        %v2082 = vpop.permute.xlu0 %2081
        %2083 = vrot.lane.b32.xlu0 %v1884, 17
        %v2084 = vpop.permute.xlu0 %2083
        %2085 = vrot.lane.b32.xlu0 %v1895, 17
        %v2086 = vpop.permute.xlu0 %2085
        %2087 = vrot.lane.b32.xlu0 %v1896, 17
        %v2088 = vpop.permute.xlu0 %2087
        %2089 = vrot.lane.b32.xlu0 %v1890, 17
        %v2090 = vpop.permute.xlu0 %2089
        %2091 = vrot.lane.b32.xlu0 %v1897, 17
        %v2092 = vpop.permute.xlu0 %2091
        %2093 = vrot.lane.b32.xlu0 %v1898, 17
        %v2094 = vpop.permute.xlu0 %2093
        %2095 = vrot.lane.b32.xlu0 %v1906, 17
        %v2096 = vpop.permute.xlu0 %2095
        %2097 = vrot.lane.b32.xlu0 %v1917, 17
        %v2098 = vpop.permute.xlu0 %2097
        %2099 = vrot.lane.b32.xlu0 %v1918, 17
        %v2100 = vpop.permute.xlu0 %2099
        %2101 = vrot.lane.b32.xlu0 %v1912, 17
        %v2102 = vpop.permute.xlu0 %2101
        %2103 = vrot.lane.b32.xlu0 %v1919, 17
        %v2104 = vpop.permute.xlu0 %2103
        %2105 = vrot.lane.b32.xlu0 %v1920, 17
        %v2106 = vpop.permute.xlu0 %2105
        %2107 = vrot.lane.b32.xlu0 %v1928, 17
        %v2108 = vpop.permute.xlu0 %2107
        %2109 = vrot.lane.b32.xlu0 %v1939, 17
        %v2110 = vpop.permute.xlu0 %2109
        %2111 = vrot.lane.b32.xlu0 %v1940, 17
        %v2112 = vpop.permute.xlu0 %2111
        %2113 = vrot.lane.b32.xlu0 %v1934, 17
        %v2114 = vpop.permute.xlu0 %2113
        %2115 = vrot.lane.b32.xlu0 %v1941, 17
        %v2116 = vpop.permute.xlu0 %2115
        %2117 = vrot.lane.b32.xlu0 %v1942, 17
        %v2118 = vpop.permute.xlu0 %2117
        %v2119 = vsel %vm585, %v2012, %v2014
        %v2120 = vsel %vm585, %v2014, %v2016
        %v2121 = vsel %vm585, %v2018, %v2020
        %v2122 = vsel %vm585, %v2020, %v2022
        %v2123 = vsel %vm585, %v2024, %v2026
        %v2124 = vsel %vm585, %v2026, %v2028
        %v2125 = vsel %vm585, %v2030, %v2032
        %v2126 = vsel %vm585, %v2032, %v2034
        %v2127 = vsel %vm585, %v2036, %v2038
        %v2128 = vsel %vm585, %v2038, %v2040
        %v2129 = vsel %vm585, %v2042, %v2044
        %v2130 = vsel %vm585, %v2044, %v2046
        %v2131 = vsel %vm585, %v2048, %v2050
        %v2132 = vsel %vm585, %v2050, %v2052
        %v2133 = vsel %vm585, %v2054, %v2056
        %v2134 = vsel %vm585, %v2056, %v2058
        %v2135 = vsel %vm585, %v2060, %v2062
        %v2136 = vsel %vm585, %v2062, %v2064
        %v2137 = vsel %vm585, %v2066, %v2068
        %v2138 = vsel %vm585, %v2068, %v2070
        %v2139 = vsel %vm585, %v2072, %v2074
        %v2140 = vsel %vm585, %v2074, %v2076
        %v2141 = vsel %vm585, %v2078, %v2080
        %v2142 = vsel %vm585, %v2080, %v2082
        %v2143 = vsel %vm585, %v2084, %v2086
        %v2144 = vsel %vm585, %v2086, %v2088
        %v2145 = vsel %vm585, %v2090, %v2092
        %v2146 = vsel %vm585, %v2092, %v2094
        %v2147 = vsel %vm585, %v2096, %v2098
        %v2148 = vsel %vm585, %v2098, %v2100
        %v2149 = vsel %vm585, %v2102, %v2104
        %v2150 = vsel %vm585, %v2104, %v2106
        %v2151 = vsel %vm585, %v2108, %v2110
        %v2152 = vsel %vm585, %v2110, %v2112
        %v2153 = vsel %vm585, %v2114, %v2116
        %v2154 = vsel %vm585, %v2116, %v2118
        %v2192 = vsel %vm1014, %v1997, 0
        %v2195 = vsel %vm1014, %v2000, 0
        %2197 = vmatprep.subr.bf16.mxu0 %v2120
        %2198 = vmatpush1.bf16.msra.mxu0 %v2119
        %2199 = vmatprep.subr.bf16.mxu0 %v2122
        %2200 = vmatpush1.bf16.msra.mxu0 %v2121
        %2201 = vmatprep.subr.bf16.mxu0 %v2124
        %2202 = vmatpush1.bf16.msra.mxu0 %v2123
        %2203 = vmatprep.subr.bf16.mxu0 %v2126
        %2204 = vmatpush1.bf16.msra.mxu0 %v2125
        %2205 = vmatprep.subr.bf16.mxu0 %v2128
        %2206 = vmatpush1.bf16.msra.mxu0 %v2127
        %2207 = vmatprep.subr.bf16.mxu0 %v2130
        %2208 = vmatpush1.bf16.msra.mxu0 %v2129
        %2209 = vmatprep.subr.bf16.mxu0 %v2132
        %2210 = vmatpush1.bf16.msra.mxu0 %v2131
        %2211 = vmatprep.subr.bf16.mxu0 %v2134
        %2212 = vmatpush1.bf16.msra.mxu0 %v2133
        %2213 = vmatprep.subr.bf16.mxu0 %v2136
        %2214 = vmatpush1.bf16.msra.mxu0 %v2135
        %2215 = vmatprep.subr.bf16.mxu0 %v2138
        %2216 = vmatpush1.bf16.msra.mxu0 %v2137
        %2217 = vmatprep.subr.bf16.mxu0 %v2140
        %2218 = vmatpush1.bf16.msra.mxu0 %v2139
        %2219 = vmatprep.subr.bf16.mxu0 %v2142
        %2220 = vmatpush1.bf16.msra.mxu0 %v2141
        %2221 = vmatprep.subr.bf16.mxu0 %v2144
        %2222 = vmatpush1.bf16.msra.mxu0 %v2143
        %2223 = vmatprep.subr.bf16.mxu0 %v2146
        %2224 = vmatpush1.bf16.msra.mxu0 %v2145
        %2225 = vmatprep.subr.bf16.mxu0 %v2148
        %2226 = vmatpush1.bf16.msra.mxu0 %v2147
        %2227 = vmatprep.subr.bf16.mxu0 %v2150
        %2228 = vmatpush1.bf16.msra.mxu0 %v2149
        %2229 = vmatprep.mubr.bf16.mxu0 %v1996
        %2230 = vmatmul.mubr.bf16.gmra.mrb[0].mxu0 %v1995
        %v2231 = vpop.f32.mrb[0].mxu0
        %v2232 = vadd.f32 %v1958, %v2231
        %v2233 = vpop.f32.mrb[0].mxu0
        %v2234 = vadd.f32 %v1958, %v2233
        %v2235 = vpop.f32.mrb[0].mxu0
        %v2236 = vadd.f32 %v1963, %v2235
        %v2237 = vpop.f32.mrb[0].mxu0
        %v2238 = vadd.f32 %v1963, %v2237
        %2239 = vmatprep.mubr.bf16.mxu0 %v1999
        %2240 = vmatmul.mubr.bf16.gmra.mrb[0].mxu0 %v1998
        %v2241 = vpop.f32.mrb[0].mxu0
        %v2242 = vadd.f32 %v1968, %v2241
        %v2243 = vpop.f32.mrb[0].mxu0
        %v2244 = vadd.f32 %v1968, %v2243
        %v2245 = vpop.f32.mrb[0].mxu0
        %v2246 = vadd.f32 %v1973, %v2245
        %v2247 = vpop.f32.mrb[0].mxu0
        %v2248 = vadd.f32 %v1973, %v2247
        %2249 = vdwg.mxu0
        %2250 = vmatprep.subr.bf16.mxu0 %v2152
        %2251 = vmatpush1.bf16.msra.mxu0 %v2151
        %2252 = vmatprep.subr.bf16.mxu0 %v2154
        %2253 = vmatpush1.bf16.msra.mxu0 %v2153
        %2254 = vmatprep.subr.bf16.mxu0 0
        %2255 = vmatpush1.bf16.msra.mxu0 0
        %2256 = vmatprep.subr.bf16.mxu0 0
        %2257 = vmatpush1.bf16.msra.mxu0 0
        %2258 = vmatprep.subr.bf16.mxu0 0
        %2259 = vmatpush1.bf16.msra.mxu0 0
        %2260 = vmatprep.subr.bf16.mxu0 0
        %2261 = vmatpush1.bf16.msra.mxu0 0
        %2262 = vmatprep.subr.bf16.mxu0 0
        %2263 = vmatpush1.bf16.msra.mxu0 0
        %2264 = vmatprep.subr.bf16.mxu0 0
        %2265 = vmatpush1.bf16.msra.mxu0 0
        %2266 = vmatprep.subr.bf16.mxu0 0
        %2267 = vmatpush1.bf16.msra.mxu0 0
        %2268 = vmatprep.subr.bf16.mxu0 0
        %2269 = vmatpush1.bf16.msra.mxu0 0
        %2270 = vmatprep.subr.bf16.mxu0 0
        %2271 = vmatpush1.bf16.msra.mxu0 0
        %2272 = vmatprep.subr.bf16.mxu0 0
        %2273 = vmatpush1.bf16.msra.mxu0 0
        %2274 = vmatprep.subr.bf16.mxu0 0
        %2275 = vmatpush1.bf16.msra.mxu0 0
        %2276 = vmatprep.subr.bf16.mxu0 0
        %2277 = vmatpush1.bf16.msra.mxu0 0
        %2278 = vmatprep.subr.bf16.mxu0 0
        %2279 = vmatpush1.bf16.msra.mxu0 0
        %2280 = vmatprep.subr.bf16.mxu0 0
        %2281 = vmatpush1.bf16.msra.mxu0 0
        %2282 = vmatprep.mubr.bf16.mxu0 0
        %2283 = vmatmul.mubr.bf16.gmra.mrb[0].mxu0 %v2192
        %v2284 = vpop.f32.mrb[0].mxu0
        %v2285 = vadd.f32 %v2232, %v2284
        %v2286 = vpop.f32.mrb[0].mxu0
        %v2287 = vadd.f32 %v2234, %v2286
        %v2288 = vpop.f32.mrb[0].mxu0
        %v2289 = vadd.f32 %v2236, %v2288
        %v2290 = vpop.f32.mrb[0].mxu0
        %v2291 = vadd.f32 %v2238, %v2290
        %2292 = vmatprep.mubr.bf16.mxu0 0
        %2293 = vmatmul.mubr.bf16.gmra.mrb[0].mxu0 %v2195
        %v2294 = vpop.f32.mrb[0].mxu0
        %v2295 = vadd.f32 %v2242, %v2294
        %v2296 = vpop.f32.mrb[0].mxu0
        %v2297 = vadd.f32 %v2244, %v2296
        %v2298 = vpop.f32.mrb[0].mxu0
        %v2299 = vadd.f32 %v2246, %v2298
        %v2300 = vpop.f32.mrb[0].mxu0
        %v2301 = vadd.f32 %v2248, %v2300
        %2302 = vdwg.mxu0
        %v2303 = vadd.f32 %v2285, %v1127
        %v2304 = vadd.f32 %v2287, %v1128
        %v2305 = vadd.f32 %v2289, %v1129
        %v2306 = vadd.f32 %v2291, %v1130
        %v2307 = vadd.f32 %v2295, %v1131
        %v2308 = vadd.f32 %v2297, %v1132
        %v2309 = vadd.f32 %v2299, %v1133
        %v2310 = vadd.f32 %v2301, %v1134
        %v2311 = vmax.f32 %v2303, 0.0
        %v2312 = vmax.f32 %v2304, 0.0
        %v2313 = vmax.f32 %v2305, 0.0
        %v2314 = vmax.f32 %v2306, 0.0
        %v2315 = vmax.f32 %v2307, 0.0
        %v2316 = vmax.f32 %v2308, 0.0
        %v2317 = vmax.f32 %v2309, 0.0
        %v2318 = vmax.f32 %v2310, 0.0
        %v2319 = vadd.f32 %v2311, %v2312
        %2320 = vadd.xlane.f32.xlu0 %v2319
        %v2321 = vpop.xlane.xlu0 %2320
        %v2322 = vadd.f32 %v2313, %v2314
        %2323 = vadd.xlane.f32.xlu0 %v2322
        %v2324 = vpop.xlane.xlu0 %2323
        %v2325 = vadd.f32 %v2315, %v2316
        %2326 = vadd.xlane.f32.xlu0 %v2325
        %v2327 = vpop.xlane.xlu0 %2326
        %v2328 = vadd.f32 %v2317, %v2318
        %2329 = vadd.xlane.f32.xlu0 %v2328
        %v2330 = vpop.xlane.xlu0 %2329
        %v2331 = vrcp.pop 256.0
        %v2332 = vmul.f32 %v2321, %v2331
        %v2333 = vmul.f32 %v2324, %v2331
        %v2334 = vmul.f32 %v2327, %v2331
        %v2335 = vmul.f32 %v2330, %v2331
        %v2336 = vlaneseq
        %v2337 = vshrl.u32 %v2336, 7
        %v2338 = vadd.s32 %v2337, 8
        %v2339 = vadd.s32 %v2337, 16
        %v2340 = vadd.s32 %v2337, 24
        %vm2341 = vcmp.eq.s32.totalorder %v2337, %v404
        %vm2342 = vcmp.eq.s32.totalorder %v2338, %v404
        %vm2343 = vcmp.eq.s32.totalorder %v2339, %v404
        %vm2344 = vcmp.eq.s32.totalorder %v2340, %v404
        %v2345 = vsel %vm2341, %v2332, 0.0
        %v2346 = vsel %vm2342, %v2333, 0.0
        %v2347 = vsel %vm2343, %v2334, 0.0
        %v2348 = vsel %vm2344, %v2335, 0.0
        %v2349 = vsel %vm1014, %v2345, 0.0
        %v2350 = vsel %vm1014, %v2346, 0.0
        %v2351 = vadd.f32 %v2349, %v2350
        %v2352 = vsel %vm1014, %v2347, 0.0
        %v2353 = vadd.f32 %v2351, %v2352
        %v2354 = vsel %vm1014, %v2348, 0.0
        %v2355 = vadd.f32 %v2353, %v2354
        %v2356 = vrot.slane %v2355, 4
        %v2357 = vadd.f32 %v2355, %v2356
        %v2358 = vrot.slane %v2357, 2
        %v2359 = vadd.f32 %v2357, %v2358
        %v2360 = vrot.slane %v2359, 1
        %v2361 = vadd.f32 %v2359, %v2360
        %vm2362 = vcmask 253952
        %2363 = vst.msk [vmem:[%s382] sm:$0x1] %vm2362, %v2361
        %v2364 = vld [vmem:[%s7] sm:$0xff]
        %v2365 = vld [vmem:[%s7 + $0x8] sm:$0xff]
        %v2366 = vld [vmem:[%s7 + $0x10] sm:$0xff]
        %v2367 = vld [vmem:[%s7 + $0x18] sm:$0xff]
        %v2368 = vmul.f32 %v2364, %v2332
        %v2369 = vmul.f32 %v2365, %v2333
        %v2370 = vmul.f32 %v2366, %v2334
        %v2371 = vmul.f32 %v2367, %v2335
        %vm2372 = vcmask 80896
        %v2373 = vsel %vm2372, %v2368, 0.0
        %v2374 = vsel %vm2372, %v2369, 0.0
        %v2375 = vadd.f32 %v2373, %v2374
        %v2376 = vsel %vm2372, %v2370, 0.0
        %v2377 = vadd.f32 %v2375, %v2376
        %v2378 = vsel %vm2372, %v2371, 0.0
        %v2379 = vadd.f32 %v2377, %v2378
        %v2380 = vrot.slane %v2379, 4
        %v2381 = vadd.f32 %v2379, %v2380
        %v2382 = vrot.slane %v2381, 2
        %v2383 = vadd.f32 %v2381, %v2382
        %v2384 = vrot.slane %v2383, 1
        %v2385 = vadd.f32 %v2383, %v2384
        %v2386 = vld [vmem:[%s8] sm:$0x1]
        %v2387 = vadd.f32 %v2385, %v2386
        %vm2388 = vcmask 73728
        %2389 = vst.msk [vmem:[%s388] sm:$0x1] %vm2388, %v2387
        %v2390 = vsel %vm2388, %v2387, -inf
        %2391 = vmax.xlane.f32.xlu0 %v2390
        %v2392 = vpop.xlane.xlu0 %2391
        %v2393 = vsub.f32 %v2387, %v2392
        %v2394 = vmul.f32 %v2393, 1.442695
        %v2395 = vpow.pop %v2394
        %v2396 = vsel %vm2388, %v2395, 0.0
        %2397 = vadd.xlane.f32.xlu0 %v2396
        %v2398 = vpop.xlane.xlu0 %2397
        %v2399 = vrcp.pop %v2398
        %v2400 = vmul.f32 %v2395, %v2399
        %2401 = vst.msk [vmem:[%s394] sm:$0x1] %vm2388, %v2400
        %s2402 = sand.u32 %s231, 1
        %s2403 = scalar_lea.sflag [#allocation4], %s2402
        %s2404 = sand.u32 %s231, 1
        %s2405 = scalar_lea.vmem [#allocation3], %s2404
        %s2406 = sand.u32 %s29, 1
        %s2407 = scalar_lea.sflag [#allocation6], %s2406
        %s2408 = sand.u32 %s257, 1
        %s2409 = scalar_lea.vmem [#allocation5], %s2408
        %s2410 = sand.u32 %s29, 1
        %s2411 = scalar_lea.sflag [#allocation6], %s2410
        %s2412 = sand.u32 %s283, 1
        %s2413 = scalar_lea.vmem [#allocation7], %s2412
        // Predicated region
        $region57: #{anchor_net_forward.1} parent=55 // pred_check
          %p2414 = pneg %p241
        $region58: #{anchor_net_forward.1} parent=55 // pred_check_branch
          %2416 = sbr.rel (%p2414) target = $region60
        $region59: #{anchor_net_forward.1} parent=55 // pred_region
          %s2418 = ssub.s32 16, 16
          %2419 = vsyncadd %s2403, %s2418
          %s2420 = smul.addr %s29, 16
          %s2421 = scalar_lea.hbm %s9, %s2420
          %s2423 = sshll.u32 %s2405, 4
          %s2424 = int_to_ptr.vmem [resolvable:$true] %s2423
          %2426 = dma.vmem_to_hbm [thread:$0]  %s2424, 16, %s2421, %s2403
        $region60: #{anchor_net_forward.1} parent=55 // pred_fallthru
          _
        // Predicated region
        $region61: #{anchor_net_forward.1} parent=55 // pred_check
          %p2427 = pneg %p267
        $region62: #{anchor_net_forward.1} parent=55 // pred_check_branch
          %2429 = sbr.rel (%p2427) target = $region64
        $region63: #{anchor_net_forward.1} parent=55 // pred_region
          %s2431 = ssub.s32 16, 16
          %2432 = vsyncadd %s2407, %s2431
          %s2433 = smul.addr %s29, 16
          %s2434 = scalar_lea.hbm %s10, %s2433
          %s2436 = sshll.u32 %s2409, 4
          %s2437 = int_to_ptr.vmem [resolvable:$true] %s2436
          %2439 = dma.vmem_to_hbm [thread:$0]  %s2437, 16, %s2434, %s2407
        $region64: #{anchor_net_forward.1} parent=55 // pred_fallthru
          _
        // Predicated region
        $region65: #{anchor_net_forward.1} parent=55 // pred_check
          %p2440 = pneg %p293
        $region66: #{anchor_net_forward.1} parent=55 // pred_check_branch
          %2442 = sbr.rel (%p2440) target = $region68
        $region67: #{anchor_net_forward.1} parent=55 // pred_region
          %s2444 = ssub.s32 16, 16
          %2445 = vsyncadd %s2411, %s2444
          %s2446 = smul.addr %s29, 16
          %s2447 = scalar_lea.hbm %s11, %s2446
          %s2449 = sshll.u32 %s2413, 4
          %s2450 = int_to_ptr.vmem [resolvable:$true] %s2449
          %2452 = dma.vmem_to_hbm [thread:$0]  %s2450, 16, %s2447, %s2411
        $region68: #{anchor_net_forward.1} parent=55 // pred_fallthru
          _
      $region56: #{anchor_net_forward.1} parent=5 // pred_fallthru
        _
      %p2453 = scmp.le.s32.totalorder 2, %s24
      // Predicated region
      $region69: #{anchor_net_forward.1} parent=5 // pred_check
        %p2454 = pneg %p2453
      $region70: #{anchor_net_forward.1} parent=5 // pred_check_branch
        %2456 = sbr.rel (%p2454) target = $region72
      $region71: #{anchor_net_forward.1} parent=5 // pred_region
        %s2457 = ssub.s32 %s24, 2
        // Predicated region
        $region73: #{anchor_net_forward.1} parent=71 // pred_check
          %p2458 = pneg %p247
        $region74: #{anchor_net_forward.1} parent=71 // pred_check_branch
          %2460 = sbr.rel (%p2458) target = $region76
        $region75: #{anchor_net_forward.1} parent=71 // pred_region
          %s2461 = sand.u32 %s232, 1
          %s2462 = scalar_lea.sflag [#allocation4], %s2461
          %s2463 = sand.u32 %s232, 1
          %s2464 = scalar_lea.vmem [#allocation3], %s2463
          %2465 = dma.done %s2462, 16
        $region76: #{anchor_net_forward.1} parent=71 // pred_fallthru
          _
        // Predicated region
        $region77: #{anchor_net_forward.1} parent=71 // pred_check
          %p2466 = pneg %p273
        $region78: #{anchor_net_forward.1} parent=71 // pred_check_branch
          %2468 = sbr.rel (%p2466) target = $region80
        $region79: #{anchor_net_forward.1} parent=71 // pred_region
          %s2469 = sand.u32 %s30, 1
          %s2470 = scalar_lea.sflag [#allocation6], %s2469
          %s2471 = sand.u32 %s258, 1
          %s2472 = scalar_lea.vmem [#allocation5], %s2471
          %2473 = dma.done %s2470, 16
        $region80: #{anchor_net_forward.1} parent=71 // pred_fallthru
          _
        // Predicated region
        $region81: #{anchor_net_forward.1} parent=71 // pred_check
          %p2474 = pneg %p299
        $region82: #{anchor_net_forward.1} parent=71 // pred_check_branch
          %2476 = sbr.rel (%p2474) target = $region84
        $region83: #{anchor_net_forward.1} parent=71 // pred_region
          %s2477 = sand.u32 %s30, 1
          %s2478 = scalar_lea.sflag [#allocation6], %s2477
          %s2479 = sand.u32 %s284, 1
          %s2480 = scalar_lea.vmem [#allocation7], %s2479
          %2481 = dma.done %s2478, 16
        $region84: #{anchor_net_forward.1} parent=71 // pred_fallthru
          _
      $region72: #{anchor_net_forward.1} parent=5 // pred_fallthru
        _
    $region6: #{anchor_net_forward.1} parent=1 // loop_footer
      %s28 = sadd.s32 1, %s24
    $region7: #{anchor_net_forward.1} parent=1 // loop_footer_branch
      %23 = sbr.rel target = $region3
    $region8: #{anchor_net_forward.1} parent=1 // loop_exit
      _
    %2482 = vsyncpa [#allocation4], 1
    %s2483 = scalar_lea.sflag [#allocation4], 1
    %2484 = vsyncpa %s2483, 1
    %2485 = vsyncpa [#allocation6], 1
    %s2486 = scalar_lea.sflag [#allocation6], 1
    %2487 = vsyncpa %s2486, 1

</llo_original>
